<compile_context>
chip_gen: v6e
topology: v6e:2x2x1
jax: 0.10.0
libtpu: 0.0.40
codegen_flags: <defaults>
</compile_context>

<pallas_src>
import functools

import jax
import jax.numpy as jnp
from jax import lax
from jax.experimental import pallas as pl
from jax.experimental.pallas import tpu as pltpu

LANE = 128
VMEM_LIMIT = 32 * 1024 * 1024


def _round_up(x, m):
    return (x + m - 1) // m * m


def _pick_node_tile(n):
    """Largest tile in {512, 256, 128} that still yields >= 2 row tiles
    (keeps a 'parallel' axis alive for v7x megacore); falls back to 128."""
    for t in (512, 256, 128):
        if _round_up(n, t) // t >= 2:
            return t
    return 128


def _pick_feature_tile(f_pad):
    """Feature-dim tile: full width when <= 512 (lane-dense, j axis vanishes)."""
    if f_pad <= 512:
        return f_pad
    for t in (512, 256, 128):
        if f_pad % t == 0:
            return t
    return LANE


# --------------------------------------------------------------------------
# Pallas kernels
# --------------------------------------------------------------------------
def matmul_bias_kernel(lhs_ref, rhs_ref, bias_ref, o_ref, acc_ref, *, apply_relu):
    """One (i, j, k) grid step of OUT = LHS @ RHS + bias (optional ReLU).

    lhs_ref : (tm, tk)  bf16
    rhs_ref : (tk, tn)  bf16
    bias_ref: (1,  tn)  f32   (row-broadcast; zeros when no bias wanted)
    o_ref   : (tm, tn)  out dtype, resident across k
    acc_ref : (tm, tn)  f32 VMEM accumulator scratch
    """
    k = pl.program_id(2)

    @pl.when(k == 0)
    def _():
        acc_ref[...] = jnp.zeros_like(acc_ref)

    acc_ref[...] += jnp.dot(lhs_ref[...], rhs_ref[...],
                            preferred_element_type=jnp.float32)

    @pl.when(k == pl.num_programs(2) - 1)
    def _():
        h = acc_ref[...] + bias_ref[...]
        if apply_relu:
            h = jnp.maximum(h, 0.0)
        o_ref[...] = h.astype(o_ref.dtype)


def pool_kernel(batch_ref, x_ref, o_ref, acc_ref, cnt_ref):
    """global_mean_pool: accumulate per-graph feature sums and node counts.

    batch_ref: (1, tile)     int32  graph id per node (-1 = padding)
    x_ref    : (tile, F_p)   bf16   node activations
    o_ref    : (G_pad, F_p)  f32    pooled output (resident across grid)
    acc_ref  : (G_pad, F_p)  f32    running sums
    cnt_ref  : (G_pad, 1)    f32    running counts
    """
    k = pl.program_id(0)

    @pl.when(k == 0)
    def _():
        acc_ref[...] = jnp.zeros_like(acc_ref)
        cnt_ref[...] = jnp.zeros_like(cnt_ref)

    g_pad = acc_ref.shape[0]
    tile = x_ref.shape[0]
    gid = lax.broadcasted_iota(jnp.int32, (g_pad, tile), 0)
    onehot = gid == batch_ref[...]                       # padding id -1 never matches
    acc_ref[...] += jnp.dot(onehot.astype(jnp.bfloat16), x_ref[...],
                            preferred_element_type=jnp.float32)
    cnt_ref[...] += onehot.astype(jnp.float32).sum(axis=1, keepdims=True)

    @pl.when(k == pl.num_programs(0) - 1)
    def _():
        o_ref[...] = acc_ref[...] / jnp.maximum(cnt_ref[...], 1.0)


# --------------------------------------------------------------------------
# Wrappers
# --------------------------------------------------------------------------
def tiled_matmul(lhs, rhs, bias, *, tm, tk, tn, apply_relu=False,
                 out_dtype=jnp.bfloat16):
    m, kk = lhs.shape
    _, n = rhs.shape
    n_i, n_j, n_k = m // tm, n // tn, kk // tk

    flops = 2 * m * kk * n
    bytes_accessed = (n_j * m * kk * lhs.dtype.itemsize        # LHS (once if n_j==1)
                      + n_i * kk * n * rhs.dtype.itemsize      # RHS re-read per i
                      + m * n * jnp.dtype(out_dtype).itemsize  # output writeback
                      + n * 4)                                 # bias
    cost = pl.CostEstimate(flops=flops, transcendentals=0,
                           bytes_accessed=bytes_accessed)

    return pl.pallas_call(
        functools.partial(matmul_bias_kernel, apply_relu=apply_relu),
        out_shape=jax.ShapeDtypeStruct((m, n), out_dtype),
        grid_spec=pltpu.PrefetchScalarGridSpec(
            num_scalar_prefetch=0,
            grid=(n_i, n_j, n_k),
            in_specs=[
                pl.BlockSpec((tm, tk), lambda i, j, k: (i, k)),
                pl.BlockSpec((tk, tn), lambda i, j, k: (k, j)),
                pl.BlockSpec((1, tn), lambda i, j, k: (0, j)),
            ],
            out_specs=pl.BlockSpec((tm, tn), lambda i, j, k: (i, j)),
            scratch_shapes=[pltpu.VMEM((tm, tn), jnp.float32)],
        ),
        compiler_params=pltpu.CompilerParams(
            dimension_semantics=("parallel", "parallel", "arbitrary"),
            vmem_limit_bytes=VMEM_LIMIT,
        ),
        cost_estimate=cost,
    )(lhs, rhs, bias)


def gcn_layer_pallas(a_pad, h, w_pad, b_pad, apply_relu, t_node):
    """out = A_norm @ (H @ W) + b  (optional fused ReLU), XW hoisted."""
    f_in_p = h.shape[1]
    f_out_p = w_pad.shape[1]
    tn = _pick_feature_tile(f_out_p)
    tk_f = _pick_feature_tile(f_in_p)

    # (1) XW computed ONCE (hoisted out of the A reduction), bf16 for the MXU.
    zero_bias = jnp.zeros((1, f_out_p), jnp.float32)
    xw = tiled_matmul(h, w_pad, zero_bias,
                      tm=t_node, tk=tk_f, tn=tn, apply_relu=False)

    # (2) A @ XW + b.  With tn == f_out_p the j axis collapses and the dense
    #     N^2 adjacency is streamed from HBM exactly once per layer.
    return tiled_matmul(a_pad, xw, b_pad,
                        tm=t_node, tk=t_node, tn=tn, apply_relu=apply_relu)


def global_mean_pool_pallas(h_pad, batch_pad_2d, num_graphs, hid_dim, t_node):
    np_, f_p = h_pad.shape
    g_pad = _round_up(max(num_graphs, 1), 8)
    t_pool = np_ if np_ <= 2048 else t_node   # one big tile when it fits
    out = pl.pallas_call(
        pool_kernel,
        out_shape=jax.ShapeDtypeStruct((g_pad, f_p), jnp.float32),
        grid_spec=pltpu.PrefetchScalarGridSpec(
            num_scalar_prefetch=0,
            grid=(np_ // t_pool,),
            in_specs=[
                pl.BlockSpec((1, t_pool), lambda k: (0, k)),
                pl.BlockSpec((t_pool, f_p), lambda k: (k, 0)),
            ],
            out_specs=pl.BlockSpec((g_pad, f_p), lambda k: (0, 0)),
            scratch_shapes=[
                pltpu.VMEM((g_pad, f_p), jnp.float32),
                pltpu.VMEM((g_pad, 1), jnp.float32),
            ],
        ),
        compiler_params=pltpu.CompilerParams(
            dimension_semantics=("arbitrary",),
            vmem_limit_bytes=VMEM_LIMIT,
        ),
    )(batch_pad_2d, h_pad)
    return out[:num_graphs, :hid_dim]


def build_norm_adj_padded(edge_index, n, n_pad):
    """Dense GCN-normalized adjacency D^{-1/2}(A+I)D^{-1/2}, built directly in
    the zero-padded (n_pad, n_pad) buffer and cast once to bf16.

    Matches PyG GCNConv conventions: edges scatter-ADD (duplicates accumulate),
    edge_index used as given (no implicit symmetrization), self-loops added.
    Unweighted graphs only (edge_weight not supported)."""
    src, dst = edge_index[0], edge_index[1]
    a = jnp.zeros((n_pad, n_pad), jnp.float32)
    a = a.at[dst, src].add(1.0)
    idx = jnp.arange(n)
    a = a.at[idx, idx].add(1.0)                     # self-loops on real nodes only
    deg = a.sum(axis=1)
    dinv = jnp.where(deg > 0, lax.rsqrt(deg), 0.0)
    a = a * dinv[:, None] * dinv[None, :]
    return a.astype(jnp.bfloat16)


def init_gnn_params(key, in_dim, hid_dim, num_layers):
    """Deterministic Glorot-uniform weights + zero bias per GCNConv layer."""
    params = []
    dims = [in_dim] + [hid_dim] * num_layers
    for i in range(num_layers):
        key, sub = jax.random.split(key)
        fan_in, fan_out = dims[i], dims[i + 1]
        limit = (6.0 / (fan_in + fan_out)) ** 0.5
        w = jax.random.uniform(
            sub, (fan_in, fan_out), jnp.float32, minval=-limit, maxval=limit
        )
        b = jnp.zeros((fan_out,), jnp.float32)
        params.append((w, b))
    return params


@functools.partial(jax.jit, static_argnames=("mode", "num_graphs"))
def gnn_forward(x, edge_index, batch, params, mode="node", num_graphs=1):
    """Mirrors GNN.forward (gcn_type='gcn', act=relu, dropout in eval mode)."""
    n, in_dim = x.shape
    hid_dim = params[-1][1].shape[0]
    t_node = _pick_node_tile(n)
    np_ = _round_up(n, t_node)

    # Normalized adjacency built ONCE directly into the padded bf16 buffer.
    a_pad = build_norm_adj_padded(edge_index, n, np_)

    # Lane-pad input features to 128; activations stay bf16 between layers.
    f_in_p = _round_up(in_dim, LANE)
    h = jnp.zeros((np_, f_in_p), jnp.bfloat16).at[:n, :in_dim].set(
        x.astype(jnp.bfloat16))

    num_layers = len(params)
    for i, (w, b) in enumerate(params):
        fi, fo = w.shape
        fi_p, fo_p = _round_up(fi, LANE), _round_up(fo, LANE)
        w_pad = jnp.zeros((fi_p, fo_p), jnp.bfloat16).at[:fi, :fo].set(
            w.astype(jnp.bfloat16))
        b_pad = jnp.zeros((1, fo_p), jnp.float32).at[0, :fo].set(b)
        apply_relu = i < num_layers - 1        # act only between layers
        h = gcn_layer_pallas(a_pad, h, w_pad, b_pad, apply_relu, t_node)
        # dropout: identity in eval mode

    if mode == "graph":
        batch_pad = jnp.full((1, np_), -1, jnp.int32).at[0, :n].set(
            batch.astype(jnp.int32))
        return global_mean_pool_pallas(h, batch_pad, num_graphs, hid_dim, t_node)
    return h[:n, :hid_dim].astype(jnp.float32)


# --------------------------------------------------------------------------
# Pure-JAX reference (f32) for tolerance checking
# --------------------------------------------------------------------------
def gnn_reference(x, edge_index, batch, params, mode, num_graphs):
    n = x.shape[0]
    src, dst = edge_index[0], edge_index[1]
    a = jnp.zeros((n, n), jnp.float32).at[dst, src].add(1.0)
    idx = jnp.arange(n)
    a = a.at[idx, idx].add(1.0)
    deg = a.sum(axis=1)
    dinv = jnp.where(deg > 0, lax.rsqrt(deg), 0.0)
    a = a * dinv[:, None] * dinv[None, :]
    h = x
    num_layers = len(params)
    for i, (w, b) in enumerate(params):
        h = a @ (h @ w) + b
        if i < num_layers - 1:
            h = jnp.maximum(h, 0.0)
    if mode == "graph":
        outs = []
        for g in range(num_graphs):
            m = (batch == g)
            s = jnp.where(m[:, None], h, 0.0).sum(axis=0)
            outs.append(s / jnp.maximum(m.sum().astype(jnp.float32), 1.0))
        return jnp.stack(outs)
    return h


# --------------------------------------------------------------------------
# Main
# --------------------------------------------------------------------------
if __name__ == "__main__":
    key = jax.random.PRNGKey(0)
    num_nodes = 200        # deliberately not a multiple of 128 (exercises padding)
    in_dim = 16
    hid_dim = 32
    num_layers = 3
    num_edges = 512
    num_graphs = 2

    k_x, k_e, k_p = jax.random.split(key, 3)
    x = jax.random.normal(k_x, (num_nodes, in_dim), jnp.float32)
    edge_index = jax.random.randint(k_e, (2, num_edges), 0, num_nodes, jnp.int32)
    batch = jnp.concatenate(
        [jnp.zeros(num_nodes // 2, jnp.int32),
         jnp.ones(num_nodes - num_nodes // 2, jnp.int32)]
    )

    params = init_gnn_params(k_p, in_dim, hid_dim, num_layers)

    out_node = gnn_forward(x, edge_index, batch, params, mode="node")
    out_graph = gnn_forward(
        x, edge_index, batch, params, mode="graph", num_graphs=num_graphs
    )
    jax.block_until_ready(out_node)
    jax.block_until_ready(out_graph)

    assert out_node.shape == (num_nodes, hid_dim)
    assert out_graph.shape == (num_graphs, hid_dim)
    assert bool(jnp.all(jnp.isfinite(out_node)))
    assert bool(jnp.all(jnp.isfinite(out_graph)))

    # Tolerance check vs. f32 reference (bf16 MXU inputs -> ~1e-2 relative).
    ref_node = gnn_reference(x, edge_index, batch, params, "node", num_graphs)
    ref_graph = gnn_reference(x, edge_index, batch, params, "graph", num_graphs)
    rel_node = float(jnp.linalg.norm(out_node - ref_node)
                     / (jnp.linalg.norm(ref_node) + 1e-6))
    rel_graph = float(jnp.linalg.norm(out_graph - ref_graph)
                      / (jnp.linalg.norm(ref_graph) + 1e-6))
    assert rel_node < 0.1, f"node rel err {rel_node}"
    assert rel_graph < 0.1, f"graph rel err {rel_graph}"

    print("KERNEL_OK")
</pallas_src>

<mosaic_0001>
module attributes {stable_mosaic.version = 11 : i64} {
  func.func private @main(%arg0: i32) attributes {dimension_semantics = [#tpu.dimension_semantics<core_parallel>], iteration_bounds = array<i64: 2>, tpu.core_type = #tpu.core_type<sc_scalar_subcore>, window_params = []} {
    return
  }
}

module attributes {stable_mosaic.version = 11 : i64} {
  func.func private @main(%arg0: i32) attributes {dimension_semantics = [#tpu.dimension_semantics<core_parallel>], iteration_bounds = array<i64: 2>, tpu.core_type = #tpu.core_type<sc_scalar_subcore>, window_params = []} {
    return
  }
}

module attributes {stable_mosaic.version = 11 : i64} {
  func.func @matmul_bias_kernel(%arg0: i32, %arg1: i32, %arg2: i32, %arg3: memref<128x128xbf16, #tpu.memory_space<vmem>>, %arg4: memref<128x128xbf16, #tpu.memory_space<vmem>>, %arg5: memref<1x128xf32, #tpu.memory_space<vmem>>, %arg6: memref<128x128xbf16, #tpu.memory_space<vmem>>, %arg7: memref<128x128xf32, #tpu.memory_space<vmem>>) attributes {dimension_semantics = [#tpu.dimension_semantics<parallel>, #tpu.dimension_semantics<parallel>, #tpu.dimension_semantics<arbitrary>], iteration_bounds = array<i64: 2, 1, 1>, scalar_prefetch = 0 : i64, scratch_operands = 1 : i64, tpu.core_type = #tpu.core_type<tc>, window_params = [{transform_indices = @transform_0, window_bounds = array<i64: 128, 128>}, {transform_indices = @transform_1, window_bounds = array<i64: 128, 128>}, {transform_indices = @transform_2, window_bounds = array<i64: 1, 128>}, {transform_indices = @transform_3, window_bounds = array<i64: 128, 128>}]} {
    %c0_i32 = arith.constant 0 : i32
    %0 = arith.cmpi eq, %arg2, %c0_i32 : i32
    %1 = arith.extui %0 : i1 to i32
    %c0_i32_0 = arith.constant 0 : i32
    %2 = arith.cmpi ne, %1, %c0_i32_0 : i32
    scf.if %2 {
      %cst_10 = arith.constant 0.000000e+00 : f32
      %12 = vector.broadcast %cst_10 : f32 to vector<128x128xf32>
      %c0_11 = arith.constant 0 : index
      %c0_12 = arith.constant 0 : index
      %13 = vector.load %arg7[%c0_11, %c0_12] : memref<128x128xf32, #tpu.memory_space<vmem>>, vector<128x128xf32>
      tpu.vector_store %arg7[%c0_11, %c0_12], %12 {strides = array<i32>} : memref<128x128xf32, #tpu.memory_space<vmem>>, vector<128x128xf32>,
    } else {
    }
    %c0 = arith.constant 0 : index
    %c0_1 = arith.constant 0 : index
    %3 = vector.load %arg7[%c0, %c0_1] : memref<128x128xf32, #tpu.memory_space<vmem>>, vector<128x128xf32>
    %c0_2 = arith.constant 0 : index
    %c0_3 = arith.constant 0 : index
    %4 = vector.load %arg3[%c0_2, %c0_3] : memref<128x128xbf16, #tpu.memory_space<vmem>>, vector<128x128xbf16>
    %c0_4 = arith.constant 0 : index
    %c0_5 = arith.constant 0 : index
    %5 = vector.load %arg4[%c0_4, %c0_5] : memref<128x128xbf16, #tpu.memory_space<vmem>>, vector<128x128xbf16>
    %cst = arith.constant dense<0.000000e+00> : vector<128x128xf32>
    %6 = tpu.matmul %4, %5, %cst {dimension_numbers = #tpu.dot_dimension_numbers<[1], [0], [0], [1], [0, 0, 1, 1], [], []>} : vector<128x128xbf16>, vector<128x128xbf16>, vector<128x128xf32> -> vector<128x128xf32>
    %7 = arith.addf %3, %6 : vector<128x128xf32>
    %c0_6 = arith.constant 0 : index
    %c0_7 = arith.constant 0 : index
    %8 = vector.load %arg7[%c0_6, %c0_7] : memref<128x128xf32, #tpu.memory_space<vmem>>, vector<128x128xf32>
    tpu.vector_store %arg7[%c0_6, %c0_7], %7 {strides = array<i32>} : memref<128x128xf32, #tpu.memory_space<vmem>>, vector<128x128xf32>,
    %c0_i32_8 = arith.constant 0 : i32
    %9 = arith.cmpi eq, %arg2, %c0_i32_8 : i32
    %10 = arith.extui %9 : i1 to i32
    %c0_i32_9 = arith.constant 0 : i32
    %11 = arith.cmpi ne, %10, %c0_i32_9 : i32
    scf.if %11 {
      %c0_10 = arith.constant 0 : index
      %c0_11 = arith.constant 0 : index
      %12 = vector.load %arg7[%c0_10, %c0_11] : memref<128x128xf32, #tpu.memory_space<vmem>>, vector<128x128xf32>
      %c0_12 = arith.constant 0 : index
      %c0_13 = arith.constant 0 : index
      %13 = vector.load %arg5[%c0_12, %c0_13] : memref<1x128xf32, #tpu.memory_space<vmem>>, vector<1x128xf32>
      %14 = vector.broadcast %13 : vector<1x128xf32> to vector<128x128xf32>
      %15 = arith.addf %12, %14 : vector<128x128xf32>
      %16 = arith.truncf %15 : vector<128x128xf32> to vector<128x128xbf16>
      %c0_14 = arith.constant 0 : index
      %c0_15 = arith.constant 0 : index
      %17 = vector.load %arg6[%c0_14, %c0_15] : memref<128x128xbf16, #tpu.memory_space<vmem>>, vector<128x128xbf16>
      tpu.vector_store %arg6[%c0_14, %c0_15], %16 {strides = array<i32>} : memref<128x128xbf16, #tpu.memory_space<vmem>>, vector<128x128xbf16>,
    } else {
    }
    return
  }
  func.func @transform_0(%arg0: i32, %arg1: i32, %arg2: i32) -> (i32, i32) {
    %c0_i32 = arith.constant 0 : i32
    return %arg0, %arg2 : i32, i32
  }
  func.func @transform_1(%arg0: i32, %arg1: i32, %arg2: i32) -> (i32, i32) {
    %c0_i32 = arith.constant 0 : i32
    return %arg2, %arg1 : i32, i32
  }
  func.func @transform_2(%arg0: i32, %arg1: i32, %arg2: i32) -> (i32, i32) {
    %c0_i32 = arith.constant 0 : i32
    %c0_i32_0 = arith.constant 0 : i32
    return %c0_i32, %arg1 : i32, i32
  }
  func.func @transform_3(%arg0: i32, %arg1: i32, %arg2: i32) -> (i32, i32) {
    %c0_i32 = arith.constant 0 : i32
    return %arg0, %arg1 : i32, i32
  }
}

module attributes {stable_mosaic.version = 11 : i64} {
  func.func @matmul_bias_kernel(%arg0: i32, %arg1: i32, %arg2: i32, %arg3: memref<128x128xbf16, #tpu.memory_space<vmem>>, %arg4: memref<128x128xbf16, #tpu.memory_space<vmem>>, %arg5: memref<1x128xf32, #tpu.memory_space<vmem>>, %arg6: memref<128x128xbf16, #tpu.memory_space<vmem>>, %arg7: memref<128x128xf32, #tpu.memory_space<vmem>>) attributes {dimension_semantics = [#tpu.dimension_semantics<parallel>, #tpu.dimension_semantics<parallel>, #tpu.dimension_semantics<arbitrary>], iteration_bounds = array<i64: 2, 1, 2>, scalar_prefetch = 0 : i64, scratch_operands = 1 : i64, tpu.core_type = #tpu.core_type<tc>, window_params = [{transform_indices = @transform_0, window_bounds = array<i64: 128, 128>}, {transform_indices = @transform_1, window_bounds = array<i64: 128, 128>}, {transform_indices = @transform_2, window_bounds = array<i64: 1, 128>}, {transform_indices = @transform_3, window_bounds = array<i64: 128, 128>}]} {
    %c0_i32 = arith.constant 0 : i32
    %0 = arith.cmpi eq, %arg2, %c0_i32 : i32
    %1 = arith.extui %0 : i1 to i32
    %c0_i32_0 = arith.constant 0 : i32
    %2 = arith.cmpi ne, %1, %c0_i32_0 : i32
    scf.if %2 {
      %cst_9 = arith.constant 0.000000e+00 : f32
      %12 = vector.broadcast %cst_9 : f32 to vector<128x128xf32>
      %c0_10 = arith.constant 0 : index
      %c0_11 = arith.constant 0 : index
      %13 = vector.load %arg7[%c0_10, %c0_11] : memref<128x128xf32, #tpu.memory_space<vmem>>, vector<128x128xf32>
      tpu.vector_store %arg7[%c0_10, %c0_11], %12 {strides = array<i32>} : memref<128x128xf32, #tpu.memory_space<vmem>>, vector<128x128xf32>,
    } else {
    }
    %c0 = arith.constant 0 : index
    %c0_1 = arith.constant 0 : index
    %3 = vector.load %arg7[%c0, %c0_1] : memref<128x128xf32, #tpu.memory_space<vmem>>, vector<128x128xf32>
    %c0_2 = arith.constant 0 : index
    %c0_3 = arith.constant 0 : index
    %4 = vector.load %arg3[%c0_2, %c0_3] : memref<128x128xbf16, #tpu.memory_space<vmem>>, vector<128x128xbf16>
    %c0_4 = arith.constant 0 : index
    %c0_5 = arith.constant 0 : index
    %5 = vector.load %arg4[%c0_4, %c0_5] : memref<128x128xbf16, #tpu.memory_space<vmem>>, vector<128x128xbf16>
    %cst = arith.constant dense<0.000000e+00> : vector<128x128xf32>
    %6 = tpu.matmul %4, %5, %cst {dimension_numbers = #tpu.dot_dimension_numbers<[1], [0], [0], [1], [0, 0, 1, 1], [], []>} : vector<128x128xbf16>, vector<128x128xbf16>, vector<128x128xf32> -> vector<128x128xf32>
    %7 = arith.addf %3, %6 : vector<128x128xf32>
    %c0_6 = arith.constant 0 : index
    %c0_7 = arith.constant 0 : index
    %8 = vector.load %arg7[%c0_6, %c0_7] : memref<128x128xf32, #tpu.memory_space<vmem>>, vector<128x128xf32>
    tpu.vector_store %arg7[%c0_6, %c0_7], %7 {strides = array<i32>} : memref<128x128xf32, #tpu.memory_space<vmem>>, vector<128x128xf32>,
    %c1_i32 = arith.constant 1 : i32
    %9 = arith.cmpi eq, %arg2, %c1_i32 : i32
    %10 = arith.extui %9 : i1 to i32
    %c0_i32_8 = arith.constant 0 : i32
    %11 = arith.cmpi ne, %10, %c0_i32_8 : i32
    scf.if %11 {
      %c0_9 = arith.constant 0 : index
      %c0_10 = arith.constant 0 : index
      %12 = vector.load %arg7[%c0_9, %c0_10] : memref<128x128xf32, #tpu.memory_space<vmem>>, vector<128x128xf32>
      %c0_11 = arith.constant 0 : index
      %c0_12 = arith.constant 0 : index
      %13 = vector.load %arg5[%c0_11, %c0_12] : memref<1x128xf32, #tpu.memory_space<vmem>>, vector<1x128xf32>
      %14 = vector.broadcast %13 : vector<1x128xf32> to vector<128x128xf32>
      %15 = arith.addf %12, %14 : vector<128x128xf32>
      %cst_13 = arith.constant 0.000000e+00 : f32
      %16 = vector.broadcast %cst_13 : f32 to vector<128x128xf32>
      %17 = arith.maximumf %15, %16 : vector<128x128xf32>
      %18 = arith.truncf %17 : vector<128x128xf32> to vector<128x128xbf16>
      %c0_14 = arith.constant 0 : index
      %c0_15 = arith.constant 0 : index
      %19 = vector.load %arg6[%c0_14, %c0_15] : memref<128x128xbf16, #tpu.memory_space<vmem>>, vector<128x128xbf16>
      tpu.vector_store %arg6[%c0_14, %c0_15], %18 {strides = array<i32>} : memref<128x128xbf16, #tpu.memory_space<vmem>>, vector<128x128xbf16>,
    } else {
    }
    return
  }
  func.func @transform_0(%arg0: i32, %arg1: i32, %arg2: i32) -> (i32, i32) {
    %c0_i32 = arith.constant 0 : i32
    return %arg0, %arg2 : i32, i32
  }
  func.func @transform_1(%arg0: i32, %arg1: i32, %arg2: i32) -> (i32, i32) {
    %c0_i32 = arith.constant 0 : i32
    return %arg2, %arg1 : i32, i32
  }
  func.func @transform_2(%arg0: i32, %arg1: i32, %arg2: i32) -> (i32, i32) {
    %c0_i32 = arith.constant 0 : i32
    %c0_i32_0 = arith.constant 0 : i32
    return %c0_i32, %arg1 : i32, i32
  }
  func.func @transform_3(%arg0: i32, %arg1: i32, %arg2: i32) -> (i32, i32) {
    %c0_i32 = arith.constant 0 : i32
    return %arg0, %arg1 : i32, i32
  }
}

module attributes {stable_mosaic.version = 11 : i64} {
  func.func @matmul_bias_kernel(%arg0: i32, %arg1: i32, %arg2: i32, %arg3: memref<128x128xbf16, #tpu.memory_space<vmem>>, %arg4: memref<128x128xbf16, #tpu.memory_space<vmem>>, %arg5: memref<1x128xf32, #tpu.memory_space<vmem>>, %arg6: memref<128x128xbf16, #tpu.memory_space<vmem>>, %arg7: memref<128x128xf32, #tpu.memory_space<vmem>>) attributes {dimension_semantics = [#tpu.dimension_semantics<parallel>, #tpu.dimension_semantics<parallel>, #tpu.dimension_semantics<arbitrary>], iteration_bounds = array<i64: 2, 1, 2>, scalar_prefetch = 0 : i64, scratch_operands = 1 : i64, tpu.core_type = #tpu.core_type<tc>, window_params = [{transform_indices = @transform_0, window_bounds = array<i64: 128, 128>}, {transform_indices = @transform_1, window_bounds = array<i64: 128, 128>}, {transform_indices = @transform_2, window_bounds = array<i64: 1, 128>}, {transform_indices = @transform_3, window_bounds = array<i64: 128, 128>}]} {
    %c0_i32 = arith.constant 0 : i32
    %0 = arith.cmpi eq, %arg2, %c0_i32 : i32
    %1 = arith.extui %0 : i1 to i32
    %c0_i32_0 = arith.constant 0 : i32
    %2 = arith.cmpi ne, %1, %c0_i32_0 : i32
    scf.if %2 {
      %cst_9 = arith.constant 0.000000e+00 : f32
      %12 = vector.broadcast %cst_9 : f32 to vector<128x128xf32>
      %c0_10 = arith.constant 0 : index
      %c0_11 = arith.constant 0 : index
      %13 = vector.load %arg7[%c0_10, %c0_11] : memref<128x128xf32, #tpu.memory_space<vmem>>, vector<128x128xf32>
      tpu.vector_store %arg7[%c0_10, %c0_11], %12 {strides = array<i32>} : memref<128x128xf32, #tpu.memory_space<vmem>>, vector<128x128xf32>,
    } else {
    }
    %c0 = arith.constant 0 : index
    %c0_1 = arith.constant 0 : index
    %3 = vector.load %arg7[%c0, %c0_1] : memref<128x128xf32, #tpu.memory_space<vmem>>, vector<128x128xf32>
    %c0_2 = arith.constant 0 : index
    %c0_3 = arith.constant 0 : index
    %4 = vector.load %arg3[%c0_2, %c0_3] : memref<128x128xbf16, #tpu.memory_space<vmem>>, vector<128x128xbf16>
    %c0_4 = arith.constant 0 : index
    %c0_5 = arith.constant 0 : index
    %5 = vector.load %arg4[%c0_4, %c0_5] : memref<128x128xbf16, #tpu.memory_space<vmem>>, vector<128x128xbf16>
    %cst = arith.constant dense<0.000000e+00> : vector<128x128xf32>
    %6 = tpu.matmul %4, %5, %cst {dimension_numbers = #tpu.dot_dimension_numbers<[1], [0], [0], [1], [0, 0, 1, 1], [], []>} : vector<128x128xbf16>, vector<128x128xbf16>, vector<128x128xf32> -> vector<128x128xf32>
    %7 = arith.addf %3, %6 : vector<128x128xf32>
    %c0_6 = arith.constant 0 : index
    %c0_7 = arith.constant 0 : index
    %8 = vector.load %arg7[%c0_6, %c0_7] : memref<128x128xf32, #tpu.memory_space<vmem>>, vector<128x128xf32>
    tpu.vector_store %arg7[%c0_6, %c0_7], %7 {strides = array<i32>} : memref<128x128xf32, #tpu.memory_space<vmem>>, vector<128x128xf32>,
    %c1_i32 = arith.constant 1 : i32
    %9 = arith.cmpi eq, %arg2, %c1_i32 : i32
    %10 = arith.extui %9 : i1 to i32
    %c0_i32_8 = arith.constant 0 : i32
    %11 = arith.cmpi ne, %10, %c0_i32_8 : i32
    scf.if %11 {
      %c0_9 = arith.constant 0 : index
      %c0_10 = arith.constant 0 : index
      %12 = vector.load %arg7[%c0_9, %c0_10] : memref<128x128xf32, #tpu.memory_space<vmem>>, vector<128x128xf32>
      %c0_11 = arith.constant 0 : index
      %c0_12 = arith.constant 0 : index
      %13 = vector.load %arg5[%c0_11, %c0_12] : memref<1x128xf32, #tpu.memory_space<vmem>>, vector<1x128xf32>
      %14 = vector.broadcast %13 : vector<1x128xf32> to vector<128x128xf32>
      %15 = arith.addf %12, %14 : vector<128x128xf32>
      %16 = arith.truncf %15 : vector<128x128xf32> to vector<128x128xbf16>
      %c0_13 = arith.constant 0 : index
      %c0_14 = arith.constant 0 : index
      %17 = vector.load %arg6[%c0_13, %c0_14] : memref<128x128xbf16, #tpu.memory_space<vmem>>, vector<128x128xbf16>
      tpu.vector_store %arg6[%c0_13, %c0_14], %16 {strides = array<i32>} : memref<128x128xbf16, #tpu.memory_space<vmem>>, vector<128x128xbf16>,
    } else {
    }
    return
  }
  func.func @transform_0(%arg0: i32, %arg1: i32, %arg2: i32) -> (i32, i32) {
    %c0_i32 = arith.constant 0 : i32
    return %arg0, %arg2 : i32, i32
  }
  func.func @transform_1(%arg0: i32, %arg1: i32, %arg2: i32) -> (i32, i32) {
    %c0_i32 = arith.constant 0 : i32
    return %arg2, %arg1 : i32, i32
  }
  func.func @transform_2(%arg0: i32, %arg1: i32, %arg2: i32) -> (i32, i32) {
    %c0_i32 = arith.constant 0 : i32
    %c0_i32_0 = arith.constant 0 : i32
    return %c0_i32, %arg1 : i32, i32
  }
  func.func @transform_3(%arg0: i32, %arg1: i32, %arg2: i32) -> (i32, i32) {
    %c0_i32 = arith.constant 0 : i32
    return %arg0, %arg1 : i32, i32
  }
}

</mosaic_0001>

<llo_original>
// kernel: gnn_forward.7
$region0: #{gnn_forward.7}
  #allocation0 [shape = 'u32[]', space=smem, size = 0x4, offset = 0x4, fixed_abs, tag = 'smem constant byte address 0x4 - core index']
  #allocation1 [shape = 'u32[144,128]{1,0:T(1,128)}', space=vmem, size = 0x12000, scoped, tag = 'internal scratch']
  #allocation2 [shape = 'f32[128,128]{1,0:T(8,128)}', space=vmem, size = 0x10000, scoped, tag = 'scratch operand']
  %s0 = inlined_call_operand.vmem [shape: bf16[256,256], index: 0, kind: input, shape index: {}]
  %s1 = inlined_call_operand.vmem [shape: bf16[256,128], index: 1, kind: input, shape index: {}]
  %s2 = inlined_call_operand.vmem [shape: f32[1,128], index: 2, kind: input, shape index: {}]
  %s3 = inlined_call_operand.vmem [shape: bf16[256,128], index: 3, kind: output, shape index: {}]
  %s4 = sld [smem:[#allocation0]]
  $region94: #{gnn_forward.7} parent=0
    _
  %s6 = ssub.s32 1, %s4
  %s7 = scalar_select 0, %s6, %s4
  $region1: #{gnn_forward.7} parent=0
    #allocation3 [shape = 'u8[65536]{0}', space=vmem, size = 0x10000, scoped, tag = 'input window, operand 0']
    loop: start=0, step=1, limit=6
    $region2: #{gnn_forward.7} parent=1 // loop_pre_header
      _
    $region3: #{gnn_forward.7} parent=1 // loop_header
      %s9 = sphi 0, %s13
      %p10 = scmp.ge.s32.totalorder %s9, 6
      %s16 = sphi 0, %s35
      %s17 = sphi 0, %s31
      %s18 = sphi 0, %s27
      %s19 = sphi 0, %s16
      %s20 = sphi 0, %s17
      %s21 = sphi 0, %s18
      %s22 = sphi 0, %s19
      %s23 = sphi 0, %s20
      %s24 = sphi 0, %s21
      %s40 = sphi 0, %s42
      %s43 = sphi 0, %s40
      %s44 = sphi 0, %s43
      %s60 = sphi 0, %s44
      %s68 = sphi 0, %s70
      %s71 = sphi 0, %s68
      %s72 = sphi 0, %s71
      %s88 = sphi 0, %s72
      %s94 = sphi 0, %s96
      %s97 = sphi 0, %s94
      %s98 = sphi 0, %s97
      %s114 = sphi 0, %s98
      %s122 = sphi 0, %s124
      %s125 = sphi 0, %s122
      %s126 = sphi 0, %s125
      %s142 = sphi 0, %s126
    $region4: #{gnn_forward.7} parent=1 // loop_header_branch
      %12 = sbr.rel (%p10) target = $region8
    $region5: #{gnn_forward.7} parent=1 // loop_body
      %s14 = ssub.s32 %s9, 1
      %s15 = ssub.s32 %s9, 2
      %s25 = sadd.s32 1, %s18
      %p26 = scmp.ge.s32.totalorder %s25, 2
      %s27 = scalar_select %p26, 0, %s25
      %s28 = sadd.s32 1, %s17
      %s29 = scalar_select %p26, %s28, %s17
      %p30 = scmp.ge.s32.totalorder %s29, 1
      %s31 = scalar_select %p30, 0, %s29
      %s32 = sadd.s32 1, %s16
      %s33 = scalar_select %p30, %s32, %s16
      %p34 = scmp.ge.s32.totalorder %s33, 2
      %s35 = scalar_select %p34, 0, %s33
      %s36 = ssub.s32 %s16, %s35
      %s37 = ssub.s32 %s18, %s27
      %s38 = sor.u32 %s36, %s37
      %p39 = scmp.eq.s32.totalorder %s38, 0
      %s41 = sadd.s32 %s40, 1
      %s42 = scalar_select %p39, %s40, %s41
      %p45 = pneg %p39
      %p46 = scmp.eq.s32.totalorder %s9, 3
      %p47 = por %p45, %p46
      %p48 = scmp.ne.s32.totalorder %s40, %s43
      %p49 = scmp.eq.s32.totalorder %s9, 0
      %p50 = por %p48, %p49
      %p51 = scmp.ne.s32.totalorder %s40, %s43
      %p52 = scmp.eq.s32.totalorder %s14, 3
      %p53 = por %p51, %p52
      %p54 = scmp.ne.s32.totalorder %s43, %s44
      %p55 = scmp.eq.s32.totalorder %s14, 0
      %p56 = por %p54, %p55
      %p57 = scmp.ne.s32.totalorder %s43, %s44
      %p58 = scmp.eq.s32.totalorder %s15, 3
      %p59 = por %p57, %p58
      %p61 = scmp.ne.s32.totalorder %s44, %s60
      %p62 = scmp.eq.s32.totalorder %s15, 0
      %p63 = por %p61, %p62
      %s64 = ssub.s32 %s18, %s27
      %s65 = ssub.s32 %s17, %s31
      %s66 = sor.u32 %s64, %s65
      %p67 = scmp.eq.s32.totalorder %s66, 0
      %s69 = sadd.s32 %s68, 1
      %s70 = scalar_select %p67, %s68, %s69
      %p73 = pneg %p67
      %p74 = scmp.eq.s32.totalorder %s9, 3
      %p75 = por %p73, %p74
      %p76 = scmp.ne.s32.totalorder %s68, %s71
      %p77 = scmp.eq.s32.totalorder %s9, 0
      %p78 = por %p76, %p77
      %p79 = scmp.ne.s32.totalorder %s68, %s71
      %p80 = scmp.eq.s32.totalorder %s14, 3
      %p81 = por %p79, %p80
      %p82 = scmp.ne.s32.totalorder %s71, %s72
      %p83 = scmp.eq.s32.totalorder %s14, 0
      %p84 = por %p82, %p83
      %p85 = scmp.ne.s32.totalorder %s71, %s72
      %p86 = scmp.eq.s32.totalorder %s15, 3
      %p87 = por %p85, %p86
      %p89 = scmp.ne.s32.totalorder %s72, %s88
      %p90 = scmp.eq.s32.totalorder %s15, 0
      %p91 = por %p89, %p90
      %s92 = ssub.s32 %s17, %s31
      %p93 = scmp.eq.s32.totalorder %s92, 0
      %s95 = sadd.s32 %s94, 1
      %s96 = scalar_select %p93, %s94, %s95
      %p99 = pneg %p93
      %p100 = scmp.eq.s32.totalorder %s9, 3
      %p101 = por %p99, %p100
      %p102 = scmp.ne.s32.totalorder %s94, %s97
      %p103 = scmp.eq.s32.totalorder %s9, 0
      %p104 = por %p102, %p103
      %p105 = scmp.ne.s32.totalorder %s94, %s97
      %p106 = scmp.eq.s32.totalorder %s14, 3
      %p107 = por %p105, %p106
      %p108 = scmp.ne.s32.totalorder %s97, %s98
      %p109 = scmp.eq.s32.totalorder %s14, 0
      %p110 = por %p108, %p109
      %p111 = scmp.ne.s32.totalorder %s97, %s98
      %p112 = scmp.eq.s32.totalorder %s15, 3
      %p113 = por %p111, %p112
      %p115 = scmp.ne.s32.totalorder %s98, %s114
      %p116 = scmp.eq.s32.totalorder %s15, 0
      %p117 = por %p115, %p116
      %s118 = ssub.s32 %s16, %s35
      %s119 = ssub.s32 %s17, %s31
      %s120 = sor.u32 %s118, %s119
      %p121 = scmp.eq.s32.totalorder %s120, 0
      %s123 = sadd.s32 %s122, 1
      %s124 = scalar_select %p121, %s122, %s123
      %p127 = pneg %p121
      %p128 = scmp.eq.s32.totalorder %s9, 3
      %p129 = por %p127, %p128
      %p130 = scmp.ne.s32.totalorder %s122, %s125
      %p131 = scmp.eq.s32.totalorder %s9, 0
      %p132 = por %p130, %p131
      %p133 = scmp.ne.s32.totalorder %s122, %s125
      %p134 = scmp.eq.s32.totalorder %s14, 3
      %p135 = por %p133, %p134
      %p136 = scmp.ne.s32.totalorder %s125, %s126
      %p137 = scmp.eq.s32.totalorder %s14, 0
      %p138 = por %p136, %p137
      %p139 = scmp.ne.s32.totalorder %s125, %s126
      %p140 = scmp.eq.s32.totalorder %s15, 3
      %p141 = por %p139, %p140
      %p143 = scmp.ne.s32.totalorder %s126, %s142
      %p144 = scmp.eq.s32.totalorder %s15, 0
      %p145 = por %p143, %p144
      %p146 = scmp.le.s32.totalorder 1, %s9
      %p147 = scmp.lt.s32.totalorder %s9, 5
      %p148 = pnand %p146, %p147
      %p149 = pneg %p148
      // Predicated region
      $region9: #{gnn_forward.7} parent=5 // pred_check
        _
      $region10: #{gnn_forward.7} parent=5 // pred_check_branch
        %151 = sbr.rel (%p148) target = $region12
      $region11: #{gnn_forward.7} parent=5 // pred_region
        %s152 = ssub.s32 %s9, 1
        // Predicated region
        $region13: #{gnn_forward.7} parent=11 // pred_check
          %p153 = pneg %p110
        $region14: #{gnn_forward.7} parent=11 // pred_check_branch
          %155 = sbr.rel (%p153) target = $region16
        $region15: #{gnn_forward.7} parent=11 // pred_region
          %p156 = scmp.lt.s32.totalorder %s20, 0
          %s157 = scalar_select %p156, %s20, 0
          %s158 = scalar_lea.vmem %s2, %s157
        $region16: #{gnn_forward.7} parent=11 // pred_fallthru
          _
      $region12: #{gnn_forward.7} parent=5 // pred_fallthru
        _
      %p159 = scmp.lt.s32.totalorder %s9, 4
      // Predicated region
      $region17: #{gnn_forward.7} parent=5 // pred_check
        %p160 = pneg %p159
      $region18: #{gnn_forward.7} parent=5 // pred_check_branch
        %162 = sbr.rel (%p160) target = $region20
      $region19: #{gnn_forward.7} parent=5 // pred_region
        // Predicated region
        $region21: #{gnn_forward.7} parent=19 // pred_check
          %p163 = pneg %p50
        $region22: #{gnn_forward.7} parent=19 // pred_check_branch
          %165 = sbr.rel (%p163) target = $region24
        $region23: #{gnn_forward.7} parent=19 // pred_region
          %s166 = sand.u32 %s40, 1
          %s167 = sand.u32 %s40, 1
          %s168 = smul.addr %s167, 64
          %s169 = scalar_lea.vmem [#allocation3], %s168
          %s170 = smul.u32 16, %s16
          %s171 = smul.addr %s170, 2
          %s172 = sadd.s32 %s18, %s171
          %s173 = smul.addr %s172, 4
          %s174 = scalar_lea.vmem %s0, %s173
          // Predicated region
          $region25: #{gnn_forward.7} parent=23 // pred_check
            _
          $region26: #{gnn_forward.7} parent=23 // pred_check_branch
            %176 = sbr.rel (0) target = $region28
          $region27: #{gnn_forward.7} parent=23 // pred_region
            // Predicated region
            $region29: #{gnn_forward.7} parent=27 // pred_check
              _
            $region30: #{gnn_forward.7} parent=27 // pred_check_branch
              %178 = sbr.rel target = $region32
            $region31: #{gnn_forward.7} parent=27 // pred_region
              // Predicated region
              $region44: #{gnn_forward.7} parent=31 // pred_check
                _
              $region45: #{gnn_forward.7} parent=31 // pred_check_branch
                %224 = sbr.rel (0) target = $region47
              $region46: #{gnn_forward.7} parent=31 // pred_region
                loop: start=0, step=1, limit=1
                $region48: #{gnn_forward.7} parent=46 // loop_pre_header
                  _
                $region49: #{gnn_forward.7} parent=46 // loop_header
                  %s226 = sphi 0, %s230
                  %p227 = scmp.ge.s32.totalorder %s226, 1
                  %s231 = sphi %s174, %s174
                  %s232 = sphi %s169, %s169
                $region50: #{gnn_forward.7} parent=46 // loop_header_branch
                  %229 = sbr.rel (%p227) target = $region54
                $region51: #{gnn_forward.7} parent=46 // loop_body
                  _
                $region52: #{gnn_forward.7} parent=46 // loop_footer
                  %s230 = sadd.s32 1, %s226
                $region53: #{gnn_forward.7} parent=46 // loop_footer_branch
                  %225 = sbr.rel target = $region49
                $region54: #{gnn_forward.7} parent=46 // loop_exit
                  _
                %s234 = ssub.s32 16, 1
                loop: start=0, step=1, limit=1
                $region55: #{gnn_forward.7} parent=46 // loop_pre_header
                  _
                $region56: #{gnn_forward.7} parent=46 // loop_header
                  %s236 = sphi 0, %s240
                  %p237 = scmp.ge.s32.totalorder %s236, 1
                  %s241 = sphi %s174, %s174
                  %s242 = sphi %s169, %s169
                $region57: #{gnn_forward.7} parent=46 // loop_header_branch
                  %239 = sbr.rel (%p237) target = $region61
                $region58: #{gnn_forward.7} parent=46 // loop_body
                  %v243 = vld [vmem:[%s241] sm:%s234]
                  %244 = vst [vmem:[%s242] sm:%s234] %v243
                  %v245 = vld [vmem:[%s241 + $0x8] sm:%s234]
                  %246 = vst [vmem:[%s242 + $0x4] sm:%s234] %v245
                  %v247 = vld [vmem:[%s241 + $0x10] sm:%s234]
                  %248 = vst [vmem:[%s242 + $0x8] sm:%s234] %v247
                  %v249 = vld [vmem:[%s241 + $0x18] sm:%s234]
                  %250 = vst [vmem:[%s242 + $0xc] sm:%s234] %v249
                  %v251 = vld [vmem:[%s241 + $0x20] sm:%s234]
                  %252 = vst [vmem:[%s242 + $0x10] sm:%s234] %v251
                  %v253 = vld [vmem:[%s241 + $0x28] sm:%s234]
                  %254 = vst [vmem:[%s242 + $0x14] sm:%s234] %v253
                  %v255 = vld [vmem:[%s241 + $0x30] sm:%s234]
                  %256 = vst [vmem:[%s242 + $0x18] sm:%s234] %v255
                  %v257 = vld [vmem:[%s241 + $0x38] sm:%s234]
                  %258 = vst [vmem:[%s242 + $0x1c] sm:%s234] %v257
                  %v259 = vld [vmem:[%s241 + $0x40] sm:%s234]
                  %260 = vst [vmem:[%s242 + $0x20] sm:%s234] %v259
                  %v261 = vld [vmem:[%s241 + $0x48] sm:%s234]
                  %262 = vst [vmem:[%s242 + $0x24] sm:%s234] %v261
                  %v263 = vld [vmem:[%s241 + $0x50] sm:%s234]
                  %264 = vst [vmem:[%s242 + $0x28] sm:%s234] %v263
                  %v265 = vld [vmem:[%s241 + $0x58] sm:%s234]
                  %266 = vst [vmem:[%s242 + $0x2c] sm:%s234] %v265
                  %v267 = vld [vmem:[%s241 + $0x60] sm:%s234]
                  %268 = vst [vmem:[%s242 + $0x30] sm:%s234] %v267
                  %v269 = vld [vmem:[%s241 + $0x68] sm:%s234]
                  %270 = vst [vmem:[%s242 + $0x34] sm:%s234] %v269
                  %v271 = vld [vmem:[%s241 + $0x70] sm:%s234]
                  %272 = vst [vmem:[%s242 + $0x38] sm:%s234] %v271
                  %v273 = vld [vmem:[%s241 + $0x78] sm:%s234]
                  %274 = vst [vmem:[%s242 + $0x3c] sm:%s234] %v273
                $region59: #{gnn_forward.7} parent=46 // loop_footer
                  %s240 = sadd.s32 1, %s236
                $region60: #{gnn_forward.7} parent=46 // loop_footer_branch
                  %235 = sbr.rel target = $region56
                $region61: #{gnn_forward.7} parent=46 // loop_exit
                  _
              $region47: #{gnn_forward.7} parent=31 // pred_fallthru
                _
            $region32: #{gnn_forward.7} parent=27 // pred_fallthru
              _
            // Predicated region
            $region33: #{gnn_forward.7} parent=27 // pred_check
              _
            $region34: #{gnn_forward.7} parent=27 // pred_check_branch
              %180 = sbr.rel (0) target = $region36
            $region35: #{gnn_forward.7} parent=27 // pred_region
              %s182 = ssub.s32 16, 1
              loop: start=0, step=1, limit=1
              $region37: #{gnn_forward.7} parent=35 // loop_pre_header
                _
              $region38: #{gnn_forward.7} parent=35 // loop_header
                %s184 = sphi 0, %s188
                %p185 = scmp.ge.s32.totalorder %s184, 1
                %s189 = sphi %s174, %s174
                %s190 = sphi %s169, %s169
              $region39: #{gnn_forward.7} parent=35 // loop_header_branch
                %187 = sbr.rel (%p185) target = $region43
              $region40: #{gnn_forward.7} parent=35 // loop_body
                %v191 = vld [vmem:[%s189] sm:%s182]
                %192 = vst [vmem:[%s190] sm:%s182] %v191
                %v193 = vld [vmem:[%s189 + $0x8] sm:%s182]
                %194 = vst [vmem:[%s190 + $0x4] sm:%s182] %v193
                %v195 = vld [vmem:[%s189 + $0x10] sm:%s182]
                %196 = vst [vmem:[%s190 + $0x8] sm:%s182] %v195
                %v197 = vld [vmem:[%s189 + $0x18] sm:%s182]
                %198 = vst [vmem:[%s190 + $0xc] sm:%s182] %v197
                %v199 = vld [vmem:[%s189 + $0x20] sm:%s182]
                %200 = vst [vmem:[%s190 + $0x10] sm:%s182] %v199
                %v201 = vld [vmem:[%s189 + $0x28] sm:%s182]
                %202 = vst [vmem:[%s190 + $0x14] sm:%s182] %v201
                %v203 = vld [vmem:[%s189 + $0x30] sm:%s182]
                %204 = vst [vmem:[%s190 + $0x18] sm:%s182] %v203
                %v205 = vld [vmem:[%s189 + $0x38] sm:%s182]
                %206 = vst [vmem:[%s190 + $0x1c] sm:%s182] %v205
                %v207 = vld [vmem:[%s189 + $0x40] sm:%s182]
                %208 = vst [vmem:[%s190 + $0x20] sm:%s182] %v207
                %v209 = vld [vmem:[%s189 + $0x48] sm:%s182]
                %210 = vst [vmem:[%s190 + $0x24] sm:%s182] %v209
                %v211 = vld [vmem:[%s189 + $0x50] sm:%s182]
                %212 = vst [vmem:[%s190 + $0x28] sm:%s182] %v211
                %v213 = vld [vmem:[%s189 + $0x58] sm:%s182]
                %214 = vst [vmem:[%s190 + $0x2c] sm:%s182] %v213
                %v215 = vld [vmem:[%s189 + $0x60] sm:%s182]
                %216 = vst [vmem:[%s190 + $0x30] sm:%s182] %v215
                %v217 = vld [vmem:[%s189 + $0x68] sm:%s182]
                %218 = vst [vmem:[%s190 + $0x34] sm:%s182] %v217
                %v219 = vld [vmem:[%s189 + $0x70] sm:%s182]
                %220 = vst [vmem:[%s190 + $0x38] sm:%s182] %v219
                %v221 = vld [vmem:[%s189 + $0x78] sm:%s182]
                %222 = vst [vmem:[%s190 + $0x3c] sm:%s182] %v221
              $region41: #{gnn_forward.7} parent=35 // loop_footer
                %s188 = sadd.s32 1, %s184
              $region42: #{gnn_forward.7} parent=35 // loop_footer_branch
                %183 = sbr.rel target = $region38
              $region43: #{gnn_forward.7} parent=35 // loop_exit
                _
            $region36: #{gnn_forward.7} parent=27 // pred_fallthru
              _
          $region28: #{gnn_forward.7} parent=23 // pred_fallthru
            _
          %275 = vnop
        $region24: #{gnn_forward.7} parent=19 // pred_fallthru
          _
        // Predicated region
        $region62: #{gnn_forward.7} parent=19 // pred_check
          %p276 = pneg %p78
        $region63: #{gnn_forward.7} parent=19 // pred_check_branch
          %278 = sbr.rel (%p276) target = $region65
        $region64: #{gnn_forward.7} parent=19 // pred_region
          %s279 = smul.u32 16, %s18
          %p280 = scmp.lt.s32.totalorder %s279, 31
          %s281 = scalar_select %p280, %s279, 31
          %p282 = scmp.lt.s32.totalorder %s17, 0
          %s283 = scalar_select %p282, %s17, 0
          %s284 = sadd.s32 %s283, %s281
          %s285 = smul.addr %s284, 4
          %s286 = scalar_lea.vmem %s1, %s285
          %s287 = smul.u32 16, %s18
        $region65: #{gnn_forward.7} parent=19 // pred_fallthru
          _
      $region20: #{gnn_forward.7} parent=5 // pred_fallthru
        _
      %p288 = scmp.le.s32.totalorder 1, %s9
      %p289 = scmp.lt.s32.totalorder %s9, 5
      %p290 = pnand %p288, %p289
      %p291 = pneg %p290
      // Predicated region
      $region66: #{gnn_forward.7} parent=5 // pred_check
        _
      $region67: #{gnn_forward.7} parent=5 // pred_check_branch
        %293 = sbr.rel (%p290) target = $region69
      $region68: #{gnn_forward.7} parent=5 // pred_region
        %s294 = ssub.s32 %s9, 1
        %s295 = sand.u32 %s43, 1
        %s296 = sand.u32 %s43, 1
        %s297 = smul.addr %s296, 64
        %s298 = scalar_lea.vmem [#allocation3], %s297
        // Predicated region
        $region70: #{gnn_forward.7} parent=68 // pred_check
          %p299 = pneg %p56
        $region71: #{gnn_forward.7} parent=68 // pred_check_branch
          %301 = sbr.rel (%p299) target = $region73
        $region72: #{gnn_forward.7} parent=68 // pred_region
          _
        $region73: #{gnn_forward.7} parent=68 // pred_fallthru
          _
        %s302 = sand.u32 %s43, 1
        %s303 = sand.u32 %s43, 1
        %s304 = smul.addr %s303, 64
        %s305 = scalar_lea.vmem [#allocation3], %s304
        %p306 = pneg %p56
        %p307 = pneg %p53
        %s308 = smul.u32 16, %s21
        %p309 = scmp.lt.s32.totalorder %s308, 31
        %s310 = scalar_select %p309, %s308, 31
        %p311 = scmp.lt.s32.totalorder %s20, 0
        %s312 = scalar_select %p311, %s20, 0
        %s313 = sadd.s32 %s312, %s310
        %s314 = smul.addr %s313, 4
        %s315 = scalar_lea.vmem %s1, %s314
        %p316 = pneg %p84
        %p317 = pneg %p81
        %p318 = scmp.lt.s32.totalorder %s20, 0
        %s319 = scalar_select %p318, %s20, 0
        %s320 = scalar_lea.vmem %s2, %s319
        %p321 = pneg %p110
        %p322 = pneg %p107
        %p323 = pneg %p138
        %p324 = pneg %p135
        %s325 = smul.u32 16, %s19
        %p326 = scmp.lt.s32.totalorder %s325, 31
        %s327 = scalar_select %p326, %s325, 31
        %p328 = scmp.lt.s32.totalorder %s20, 0
        %s329 = scalar_select %p328, %s20, 0
        %s330 = sadd.s32 %s329, %s327
        %s331 = smul.addr %s330, 4
        %s332 = scalar_lea.vmem %s3, %s331
        %s333 = smul.u32 16, %s19
        %s334 = smul.u32 16, %s21
        %p335 = scmp.lt.s32.totalorder %s334, 31
        %s336 = scalar_select %p335, %s334, 31
        %p337 = scmp.lt.s32.totalorder %s20, 0
        %s338 = scalar_select %p337, %s20, 0
        %s339 = sadd.s32 %s338, %s336
        %s340 = smul.addr %s339, 4
        %s341 = scalar_lea.vmem %s1, %s340
        %s342 = smul.u32 16, %s21
        %p343 = scmp.lt.s32.totalorder %s20, 0
        %s344 = scalar_select %p343, %s20, 0
        %s345 = scalar_lea.vmem %s2, %s344
        %s346 = smul.u32 16, %s19
        %p347 = scmp.lt.s32.totalorder %s346, 31
        %s348 = scalar_select %p347, %s346, 31
        %p349 = scmp.lt.s32.totalorder %s20, 0
        %s350 = scalar_select %p349, %s20, 0
        %s351 = sadd.s32 %s350, %s348
        %s352 = smul.addr %s351, 4
        %s353 = scalar_lea.vmem %s3, %s352
        %s354 = smul.u32 16, %s19
        %p356 = scmp.eq.s32.totalorder %s21, 0
        // Predicated region
        $region74: #{gnn_forward.7} parent=68 // pred_check
          %p357 = pneg %p356
        $region75: #{gnn_forward.7} parent=68 // pred_check_branch
          %359 = sbr.rel (%p357) target = $region77
        $region76: #{gnn_forward.7} parent=68 // pred_region
          %360 = vst [vmem:[#allocation2] sm:$0xff] 0.0
          %361 = vst [vmem:[#allocation2 + $0x8] sm:$0xff] 0.0
          %362 = vst [vmem:[#allocation2 + $0x10] sm:$0xff] 0.0
          %363 = vst [vmem:[#allocation2 + $0x18] sm:$0xff] 0.0
          %364 = vst [vmem:[#allocation2 + $0x20] sm:$0xff] 0.0
          %365 = vst [vmem:[#allocation2 + $0x28] sm:$0xff] 0.0
          %366 = vst [vmem:[#allocation2 + $0x30] sm:$0xff] 0.0
          %367 = vst [vmem:[#allocation2 + $0x38] sm:$0xff] 0.0
          %368 = vst [vmem:[#allocation2 + $0x40] sm:$0xff] 0.0
          %369 = vst [vmem:[#allocation2 + $0x48] sm:$0xff] 0.0
          %370 = vst [vmem:[#allocation2 + $0x50] sm:$0xff] 0.0
          %371 = vst [vmem:[#allocation2 + $0x58] sm:$0xff] 0.0
          %372 = vst [vmem:[#allocation2 + $0x60] sm:$0xff] 0.0
          %373 = vst [vmem:[#allocation2 + $0x68] sm:$0xff] 0.0
          %374 = vst [vmem:[#allocation2 + $0x70] sm:$0xff] 0.0
          %375 = vst [vmem:[#allocation2 + $0x78] sm:$0xff] 0.0
        $region77: #{gnn_forward.7} parent=68 // pred_fallthru
          _
        %v376 = vld [vmem:[#allocation2] sm:$0xff]
        %v377 = vld [vmem:[#allocation2 + $0x8] sm:$0xff]
        %v378 = vld [vmem:[#allocation2 + $0x10] sm:$0xff]
        %v379 = vld [vmem:[#allocation2 + $0x18] sm:$0xff]
        %v380 = vld [vmem:[#allocation2 + $0x20] sm:$0xff]
        %v381 = vld [vmem:[#allocation2 + $0x28] sm:$0xff]
        %v382 = vld [vmem:[#allocation2 + $0x30] sm:$0xff]
        %v383 = vld [vmem:[#allocation2 + $0x38] sm:$0xff]
        %v384 = vld [vmem:[#allocation2 + $0x40] sm:$0xff]
        %v385 = vld [vmem:[#allocation2 + $0x48] sm:$0xff]
        %v386 = vld [vmem:[#allocation2 + $0x50] sm:$0xff]
        %v387 = vld [vmem:[#allocation2 + $0x58] sm:$0xff]
        %v388 = vld [vmem:[#allocation2 + $0x60] sm:$0xff]
        %v389 = vld [vmem:[#allocation2 + $0x68] sm:$0xff]
        %v390 = vld [vmem:[#allocation2 + $0x70] sm:$0xff]
        %v391 = vld [vmem:[#allocation2 + $0x78] sm:$0xff]
        %v392 = vld [vmem:[%s298] sm:$0xf]
        %v393 = vld [vmem:[%s298 + $0x4] sm:$0xf]
        %v394 = vld [vmem:[%s298 + $0x8] sm:$0xf]
        %v395 = vld [vmem:[%s298 + $0xc] sm:$0xf]
        %v396 = vld [vmem:[%s298 + $0x10] sm:$0xf]
        %v397 = vld [vmem:[%s298 + $0x14] sm:$0xf]
        %v398 = vld [vmem:[%s298 + $0x18] sm:$0xf]
        %v399 = vld [vmem:[%s298 + $0x1c] sm:$0xf]
        %v400 = vld [vmem:[%s298 + $0x20] sm:$0xf]
        %v401 = vld [vmem:[%s298 + $0x24] sm:$0xf]
        %v402 = vld [vmem:[%s298 + $0x28] sm:$0xf]
        %v403 = vld [vmem:[%s298 + $0x2c] sm:$0xf]
        %v404 = vld [vmem:[%s298 + $0x30] sm:$0xf]
        %v405 = vld [vmem:[%s298 + $0x34] sm:$0xf]
        %v406 = vld [vmem:[%s298 + $0x38] sm:$0xf]
        %v407 = vld [vmem:[%s298 + $0x3c] sm:$0xf]
        %v408 = vld [vmem:[%s341] sm:$0xf]
        %v409 = vld [vmem:[%s341 + $0x4] sm:$0xf]
        %v410 = vld [vmem:[%s341 + $0x8] sm:$0xf]
        %v411 = vld [vmem:[%s341 + $0xc] sm:$0xf]
        %v412 = vld [vmem:[%s341 + $0x10] sm:$0xf]
        %v413 = vld [vmem:[%s341 + $0x14] sm:$0xf]
        %v414 = vld [vmem:[%s341 + $0x18] sm:$0xf]
        %v415 = vld [vmem:[%s341 + $0x1c] sm:$0xf]
        %v416 = vld [vmem:[%s341 + $0x20] sm:$0xf]
        %v417 = vld [vmem:[%s341 + $0x24] sm:$0xf]
        %v418 = vld [vmem:[%s341 + $0x28] sm:$0xf]
        %v419 = vld [vmem:[%s341 + $0x2c] sm:$0xf]
        %v420 = vld [vmem:[%s341 + $0x30] sm:$0xf]
        %v421 = vld [vmem:[%s341 + $0x34] sm:$0xf]
        %v422 = vld [vmem:[%s341 + $0x38] sm:$0xf]
        %v423 = vld [vmem:[%s341 + $0x3c] sm:$0xf]
        %v440 = vunpack.c.l.b16 %v392
        %v441 = vunpack.c.l.b16 %v393
        %v442 = vunpack.c.l.b16 %v394
        %v443 = vunpack.c.l.b16 %v395
        %v444 = vunpack.c.l.b16 %v396
        %v445 = vunpack.c.l.b16 %v397
        %v446 = vunpack.c.l.b16 %v398
        %v447 = vunpack.c.l.b16 %v399
        %v448 = vunpack.c.l.b16 %v400
        %v449 = vunpack.c.l.b16 %v401
        %v450 = vunpack.c.l.b16 %v402
        %v451 = vunpack.c.l.b16 %v403
        %v452 = vunpack.c.l.b16 %v404
        %v453 = vunpack.c.l.b16 %v405
        %v454 = vunpack.c.l.b16 %v406
        %v455 = vunpack.c.l.b16 %v407
        %v456 = vpack.c.b16 %v441, %v440
        %v457 = vpack.c.b16 %v443, %v442
        %v458 = vpack.c.b16 %v445, %v444
        %v459 = vpack.c.b16 %v447, %v446
        %v460 = vpack.c.b16 %v449, %v448
        %v461 = vpack.c.b16 %v451, %v450
        %v462 = vpack.c.b16 %v453, %v452
        %v463 = vpack.c.b16 %v455, %v454
        %v488 = vunpack.c.l.b16 %v408
        %v489 = vunpack.c.l.b16 %v409
        %v490 = vunpack.c.l.b16 %v410
        %v491 = vunpack.c.l.b16 %v411
        %v492 = vunpack.c.l.b16 %v412
        %v493 = vunpack.c.l.b16 %v413
        %v494 = vunpack.c.l.b16 %v414
        %v495 = vunpack.c.l.b16 %v415
        %v496 = vunpack.c.l.b16 %v416
        %v497 = vunpack.c.l.b16 %v417
        %v498 = vunpack.c.l.b16 %v418
        %v499 = vunpack.c.l.b16 %v419
        %v500 = vunpack.c.l.b16 %v420
        %v501 = vunpack.c.l.b16 %v421
        %v502 = vunpack.c.l.b16 %v422
        %v503 = vunpack.c.l.b16 %v423
        %v504 = vpack.c.b16 %v489, %v488
        %v505 = vpack.c.b16 %v491, %v490
        %v506 = vpack.c.b16 %v493, %v492
        %v507 = vpack.c.b16 %v495, %v494
        %v508 = vpack.c.b16 %v497, %v496
        %v509 = vpack.c.b16 %v499, %v498
        %v510 = vpack.c.b16 %v501, %v500
        %v511 = vpack.c.b16 %v503, %v502
        %520 = vmatprep.subr.bf16.mxu0 0
        %521 = vmatpush1.bf16.msra.mxu0 %v511
        %522 = vmatprep.subr.bf16.mxu0 0
        %523 = vmatpush1.bf16.msra.mxu0 %v510
        %524 = vmatprep.subr.bf16.mxu0 0
        %525 = vmatpush1.bf16.msra.mxu0 %v509
        %526 = vmatprep.subr.bf16.mxu0 0
        %527 = vmatpush1.bf16.msra.mxu0 %v508
        %528 = vmatprep.subr.bf16.mxu0 0
        %529 = vmatpush1.bf16.msra.mxu0 %v507
        %530 = vmatprep.subr.bf16.mxu0 0
        %531 = vmatpush1.bf16.msra.mxu0 %v506
        %532 = vmatprep.subr.bf16.mxu0 0
        %533 = vmatpush1.bf16.msra.mxu0 %v505
        %534 = vmatprep.subr.bf16.mxu0 0
        %535 = vmatpush1.bf16.msra.mxu0 %v504
        %536 = vmatprep.subr.bf16.mxu0 0
        %537 = vmatpush2.bf16.msra.mxu0 0
        %538 = vmatprep.subr.bf16.mxu0 0
        %539 = vmatpush2.bf16.msra.mxu0 0
        %540 = vmatprep.subr.bf16.mxu0 0
        %541 = vmatpush2.bf16.msra.mxu0 0
        %542 = vmatprep.subr.bf16.mxu0 0
        %543 = vmatpush2.bf16.msra.mxu0 0
        %544 = vmatprep.subr.bf16.mxu0 0
        %545 = vmatpush2.bf16.msra.mxu0 0
        %546 = vmatprep.subr.bf16.mxu0 0
        %547 = vmatpush2.bf16.msra.mxu0 0
        %548 = vmatprep.subr.bf16.mxu0 0
        %549 = vmatpush2.bf16.msra.mxu0 0
        %550 = vmatprep.subr.bf16.mxu0 0
        %551 = vmatpush2.bf16.msra.mxu0 0
        %552 = vmatprep.mubr.bf16.mxu0 0
        %553 = vmatmul.mubr.bf16.gmra.mxu0 %v456
        %v554 = vpop.f32.mrf.mxu0
        %v555 = vadd.f32 0.0, %v554
        %v556 = vpop.f32.mrf.mxu0
        %v557 = vpop.f32.mrf.mxu0
        %v558 = vadd.f32 0.0, %v557
        %v559 = vpop.f32.mrf.mxu0
        %560 = vmatprep.mubr.bf16.mxu0 0
        %561 = vmatmul.mubr.bf16.gmra.mxu0 %v457
        %v562 = vpop.f32.mrf.mxu0
        %v563 = vadd.f32 0.0, %v562
        %v564 = vpop.f32.mrf.mxu0
        %v565 = vpop.f32.mrf.mxu0
        %v566 = vadd.f32 0.0, %v565
        %v567 = vpop.f32.mrf.mxu0
        %568 = vmatprep.mubr.bf16.mxu0 0
        %569 = vmatmul.mubr.bf16.gmra.mxu0 %v458
        %v570 = vpop.f32.mrf.mxu0
        %v571 = vadd.f32 0.0, %v570
        %v572 = vpop.f32.mrf.mxu0
        %v573 = vpop.f32.mrf.mxu0
        %v574 = vadd.f32 0.0, %v573
        %v575 = vpop.f32.mrf.mxu0
        %576 = vmatprep.mubr.bf16.mxu0 0
        %577 = vmatmul.mubr.bf16.gmra.mxu0 %v459
        %v578 = vpop.f32.mrf.mxu0
        %v579 = vadd.f32 0.0, %v578
        %v580 = vpop.f32.mrf.mxu0
        %v581 = vpop.f32.mrf.mxu0
        %v582 = vadd.f32 0.0, %v581
        %v583 = vpop.f32.mrf.mxu0
        %584 = vmatprep.mubr.bf16.mxu0 0
        %585 = vmatmul.mubr.bf16.gmra.mxu0 %v460
        %v586 = vpop.f32.mrf.mxu0
        %v587 = vadd.f32 0.0, %v586
        %v588 = vpop.f32.mrf.mxu0
        %v589 = vpop.f32.mrf.mxu0
        %v590 = vadd.f32 0.0, %v589
        %v591 = vpop.f32.mrf.mxu0
        %592 = vmatprep.mubr.bf16.mxu0 0
        %593 = vmatmul.mubr.bf16.gmra.mxu0 %v461
        %v594 = vpop.f32.mrf.mxu0
        %v595 = vadd.f32 0.0, %v594
        %v596 = vpop.f32.mrf.mxu0
        %v597 = vpop.f32.mrf.mxu0
        %v598 = vadd.f32 0.0, %v597
        %v599 = vpop.f32.mrf.mxu0
        %600 = vmatprep.mubr.bf16.mxu0 0
        %601 = vmatmul.mubr.bf16.gmra.mxu0 %v462
        %v602 = vpop.f32.mrf.mxu0
        %v603 = vadd.f32 0.0, %v602
        %v604 = vpop.f32.mrf.mxu0
        %v605 = vpop.f32.mrf.mxu0
        %v606 = vadd.f32 0.0, %v605
        %v607 = vpop.f32.mrf.mxu0
        %608 = vmatprep.mubr.bf16.mxu0 0
        %609 = vmatmul.mubr.bf16.gmra.mxu0 %v463
        %v610 = vpop.f32.mrf.mxu0
        %v611 = vadd.f32 0.0, %v610
        %v612 = vpop.f32.mrf.mxu0
        %v613 = vpop.f32.mrf.mxu0
        %v614 = vadd.f32 0.0, %v613
        %v615 = vpop.f32.mrf.mxu0
        %616 = vdwg.mxu0
        %v617 = vadd.f32 %v376, %v555
        %v618 = vadd.f32 %v377, %v558
        %v619 = vadd.f32 %v378, %v563
        %v620 = vadd.f32 %v379, %v566
        %v621 = vadd.f32 %v380, %v571
        %v622 = vadd.f32 %v381, %v574
        %v623 = vadd.f32 %v382, %v579
        %v624 = vadd.f32 %v383, %v582
        %v625 = vadd.f32 %v384, %v587
        %v626 = vadd.f32 %v385, %v590
        %v627 = vadd.f32 %v386, %v595
        %v628 = vadd.f32 %v387, %v598
        %v629 = vadd.f32 %v388, %v603
        %v630 = vadd.f32 %v389, %v606
        %v631 = vadd.f32 %v390, %v611
        %v632 = vadd.f32 %v391, %v614
        %633 = vst [vmem:[#allocation2] sm:$0xff] %v617
        %634 = vst [vmem:[#allocation2 + $0x8] sm:$0xff] %v618
        %635 = vst [vmem:[#allocation2 + $0x10] sm:$0xff] %v619
        %636 = vst [vmem:[#allocation2 + $0x18] sm:$0xff] %v620
        %637 = vst [vmem:[#allocation2 + $0x20] sm:$0xff] %v621
        %638 = vst [vmem:[#allocation2 + $0x28] sm:$0xff] %v622
        %639 = vst [vmem:[#allocation2 + $0x30] sm:$0xff] %v623
        %640 = vst [vmem:[#allocation2 + $0x38] sm:$0xff] %v624
        %641 = vst [vmem:[#allocation2 + $0x40] sm:$0xff] %v625
        %642 = vst [vmem:[#allocation2 + $0x48] sm:$0xff] %v626
        %643 = vst [vmem:[#allocation2 + $0x50] sm:$0xff] %v627
        %644 = vst [vmem:[#allocation2 + $0x58] sm:$0xff] %v628
        %645 = vst [vmem:[#allocation2 + $0x60] sm:$0xff] %v629
        %646 = vst [vmem:[#allocation2 + $0x68] sm:$0xff] %v630
        %647 = vst [vmem:[#allocation2 + $0x70] sm:$0xff] %v631
        %648 = vst [vmem:[#allocation2 + $0x78] sm:$0xff] %v632
        %p649 = scmp.eq.s32.totalorder %s21, 1
        // Predicated region
        $region78: #{gnn_forward.7} parent=68 // pred_check
          %p650 = pneg %p649
        $region79: #{gnn_forward.7} parent=68 // pred_check_branch
          %652 = sbr.rel (%p650) target = $region81
        $region80: #{gnn_forward.7} parent=68 // pred_region
          %v653 = vld [vmem:[#allocation2] sm:$0xff]
          %v654 = vld [vmem:[#allocation2 + $0x8] sm:$0xff]
          %v655 = vld [vmem:[#allocation2 + $0x10] sm:$0xff]
          %v656 = vld [vmem:[#allocation2 + $0x18] sm:$0xff]
          %v657 = vld [vmem:[#allocation2 + $0x20] sm:$0xff]
          %v658 = vld [vmem:[#allocation2 + $0x28] sm:$0xff]
          %v659 = vld [vmem:[#allocation2 + $0x30] sm:$0xff]
          %v660 = vld [vmem:[#allocation2 + $0x38] sm:$0xff]
          %v661 = vld [vmem:[#allocation2 + $0x40] sm:$0xff]
          %v662 = vld [vmem:[#allocation2 + $0x48] sm:$0xff]
          %v663 = vld [vmem:[#allocation2 + $0x50] sm:$0xff]
          %v664 = vld [vmem:[#allocation2 + $0x58] sm:$0xff]
          %v665 = vld [vmem:[#allocation2 + $0x60] sm:$0xff]
          %v666 = vld [vmem:[#allocation2 + $0x68] sm:$0xff]
          %v667 = vld [vmem:[#allocation2 + $0x70] sm:$0xff]
          %v668 = vld [vmem:[#allocation2 + $0x78] sm:$0xff]
          %v669 = vld [vmem:[%s345] sm:$0x1]
          %v671 = vlaneseq
          %v672 = vshrl.u32 %v671, 7
          %v673 = vsub.s32 0, %v672
          %v674 = vrot.slane %v669, %v673
          %v676 = vadd.f32 %v653, %v674
          %v677 = vadd.f32 %v654, %v674
          %v678 = vadd.f32 %v655, %v674
          %v679 = vadd.f32 %v656, %v674
          %v680 = vadd.f32 %v657, %v674
          %v681 = vadd.f32 %v658, %v674
          %v682 = vadd.f32 %v659, %v674
          %v683 = vadd.f32 %v660, %v674
          %v684 = vadd.f32 %v661, %v674
          %v685 = vadd.f32 %v662, %v674
          %v686 = vadd.f32 %v663, %v674
          %v687 = vadd.f32 %v664, %v674
          %v688 = vadd.f32 %v665, %v674
          %v689 = vadd.f32 %v666, %v674
          %v690 = vadd.f32 %v667, %v674
          %v691 = vadd.f32 %v668, %v674
          %v692 = vmax.f32 %v676, 0.0
          %v693 = vmax.f32 %v677, 0.0
          %v694 = vmax.f32 %v678, 0.0
          %v695 = vmax.f32 %v679, 0.0
          %v696 = vmax.f32 %v680, 0.0
          %v697 = vmax.f32 %v681, 0.0
          %v698 = vmax.f32 %v682, 0.0
          %v699 = vmax.f32 %v683, 0.0
          %v700 = vmax.f32 %v684, 0.0
          %v701 = vmax.f32 %v685, 0.0
          %v702 = vmax.f32 %v686, 0.0
          %v703 = vmax.f32 %v687, 0.0
          %v704 = vmax.f32 %v688, 0.0
          %v705 = vmax.f32 %v689, 0.0
          %v706 = vmax.f32 %v690, 0.0
          %v707 = vmax.f32 %v691, 0.0
          %v708 = vpack.c.bf16 %v693, %v692
          %v709 = vpack.c.bf16 %v695, %v694
          %v710 = vpack.c.bf16 %v697, %v696
          %v711 = vpack.c.bf16 %v699, %v698
          %v712 = vpack.c.bf16 %v701, %v700
          %v713 = vpack.c.bf16 %v703, %v702
          %v714 = vpack.c.bf16 %v705, %v704
          %v715 = vpack.c.bf16 %v707, %v706
          %v724 = vunpack.c.l.b16 %v708
          %v725 = vunpack.c.h.b16 %v708
          %v726 = vunpack.c.l.b16 %v709
          %v727 = vunpack.c.h.b16 %v709
          %v728 = vunpack.c.l.b16 %v710
          %v729 = vunpack.c.h.b16 %v710
          %v730 = vunpack.c.l.b16 %v711
          %v731 = vunpack.c.h.b16 %v711
          %v732 = vunpack.c.l.b16 %v712
          %v733 = vunpack.c.h.b16 %v712
          %v734 = vunpack.c.l.b16 %v713
          %v735 = vunpack.c.h.b16 %v713
          %v736 = vunpack.c.l.b16 %v714
          %v737 = vunpack.c.h.b16 %v714
          %v738 = vunpack.c.l.b16 %v715
          %v739 = vunpack.c.h.b16 %v715
          %v740 = vpack.c.b16 %v724, %v724
          %v741 = vpack.c.b16 %v725, %v725
          %v742 = vpack.c.b16 %v726, %v726
          %v743 = vpack.c.b16 %v727, %v727
          %v744 = vpack.c.b16 %v728, %v728
          %v745 = vpack.c.b16 %v729, %v729
          %v746 = vpack.c.b16 %v730, %v730
          %v747 = vpack.c.b16 %v731, %v731
          %v748 = vpack.c.b16 %v732, %v732
          %v749 = vpack.c.b16 %v733, %v733
          %v750 = vpack.c.b16 %v734, %v734
          %v751 = vpack.c.b16 %v735, %v735
          %v752 = vpack.c.b16 %v736, %v736
          %v753 = vpack.c.b16 %v737, %v737
          %v754 = vpack.c.b16 %v738, %v738
          %v755 = vpack.c.b16 %v739, %v739
          %772 = vst [vmem:[%s353] sm:$0xf] %v740
          %773 = vst [vmem:[%s353 + $0x4] sm:$0xf] %v741
          %774 = vst [vmem:[%s353 + $0x8] sm:$0xf] %v742
          %775 = vst [vmem:[%s353 + $0xc] sm:$0xf] %v743
          %776 = vst [vmem:[%s353 + $0x10] sm:$0xf] %v744
          %777 = vst [vmem:[%s353 + $0x14] sm:$0xf] %v745
          %778 = vst [vmem:[%s353 + $0x18] sm:$0xf] %v746
          %779 = vst [vmem:[%s353 + $0x1c] sm:$0xf] %v747
          %780 = vst [vmem:[%s353 + $0x20] sm:$0xf] %v748
          %781 = vst [vmem:[%s353 + $0x24] sm:$0xf] %v749
          %782 = vst [vmem:[%s353 + $0x28] sm:$0xf] %v750
          %783 = vst [vmem:[%s353 + $0x2c] sm:$0xf] %v751
          %784 = vst [vmem:[%s353 + $0x30] sm:$0xf] %v752
          %785 = vst [vmem:[%s353 + $0x34] sm:$0xf] %v753
          %786 = vst [vmem:[%s353 + $0x38] sm:$0xf] %v754
          %787 = vst [vmem:[%s353 + $0x3c] sm:$0xf] %v755
        $region81: #{gnn_forward.7} parent=68 // pred_fallthru
          _
        %s788 = smul.u32 16, %s19
        %p789 = scmp.lt.s32.totalorder %s788, 31
        %s790 = scalar_select %p789, %s788, 31
        %p791 = scmp.lt.s32.totalorder %s20, 0
        %s792 = scalar_select %p791, %s20, 0
        %s793 = sadd.s32 %s792, %s790
        %s794 = smul.addr %s793, 4
        %s795 = scalar_lea.vmem %s3, %s794
        // Predicated region
        $region82: #{gnn_forward.7} parent=68 // pred_check
          %p796 = pneg %p135
        $region83: #{gnn_forward.7} parent=68 // pred_check_branch
          %798 = sbr.rel (%p796) target = $region85
        $region84: #{gnn_forward.7} parent=68 // pred_region
          %s799 = smul.u32 16, %s19
        $region85: #{gnn_forward.7} parent=68 // pred_fallthru
          _
      $region69: #{gnn_forward.7} parent=5 // pred_fallthru
        _
      %p800 = scmp.le.s32.totalorder 2, %s9
      // Predicated region
      $region86: #{gnn_forward.7} parent=5 // pred_check
        %p801 = pneg %p800
      $region87: #{gnn_forward.7} parent=5 // pred_check_branch
        %803 = sbr.rel (%p801) target = $region89
      $region88: #{gnn_forward.7} parent=5 // pred_region
        %s804 = ssub.s32 %s9, 2
        // Predicated region
        $region90: #{gnn_forward.7} parent=88 // pred_check
          %p805 = pneg %p141
        $region91: #{gnn_forward.7} parent=88 // pred_check_branch
          %807 = sbr.rel (%p805) target = $region93
        $region92: #{gnn_forward.7} parent=88 // pred_region
          %s808 = smul.u32 16, %s22
          %p809 = scmp.lt.s32.totalorder %s808, 31
          %s810 = scalar_select %p809, %s808, 31
          %p811 = scmp.lt.s32.totalorder %s23, 0
          %s812 = scalar_select %p811, %s23, 0
          %s813 = sadd.s32 %s812, %s810
          %s814 = smul.addr %s813, 4
          %s815 = scalar_lea.vmem %s3, %s814
        $region93: #{gnn_forward.7} parent=88 // pred_fallthru
          _
      $region89: #{gnn_forward.7} parent=5 // pred_fallthru
        _
    $region6: #{gnn_forward.7} parent=1 // loop_footer
      %s13 = sadd.s32 1, %s9
    $region7: #{gnn_forward.7} parent=1 // loop_footer_branch
      %8 = sbr.rel target = $region3
    $region8: #{gnn_forward.7} parent=1 // loop_exit
      _

// kernel: gnn_forward.6
$region0: #{gnn_forward.6}
  #allocation0 [shape = 'u32[]', space=smem, size = 0x4, offset = 0x4, fixed_abs, tag = 'smem constant byte address 0x4 - core index']
  #allocation1 [shape = 'u32[144,128]{1,0:T(1,128)}', space=vmem, size = 0x12000, scoped, tag = 'internal scratch']
  #allocation2 [shape = 'f32[128,128]{1,0:T(8,128)}', space=vmem, size = 0x10000, scoped, tag = 'scratch operand']
  %s0 = inlined_call_operand.vmem [shape: bf16[256,128], index: 0, kind: input, shape index: {}]
  %s1 = inlined_call_operand.vmem [shape: bf16[128,128], index: 1, kind: input, shape index: {}]
  %s2 = inlined_call_operand.vmem [shape: f32[1,128], index: 2, kind: input, shape index: {}]
  %s3 = inlined_call_operand.vmem [shape: bf16[256,128], index: 3, kind: output, shape index: {}]
  %s4 = sld [smem:[#allocation0]]
  $region53: #{gnn_forward.6} parent=0
    _
  %s6 = ssub.s32 1, %s4
  %s7 = scalar_select 0, %s6, %s4
  loop: start=0, step=1, limit=4
  $region2: #{gnn_forward.6} parent=0 // loop_pre_header
    _
  $region3: #{gnn_forward.6} parent=0 // loop_header
    %s9 = sphi 0, %s13
    %p10 = scmp.ge.s32.totalorder %s9, 4
    %s16 = sphi 0, %s35
    %s17 = sphi 0, %s31
    %s18 = sphi 0, %s27
    %s19 = sphi 0, %s16
    %s20 = sphi 0, %s17
    %s21 = sphi 0, %s18
    %s22 = sphi 0, %s19
    %s23 = sphi 0, %s20
    %s24 = sphi 0, %s21
    %s40 = sphi 0, %s42
    %s43 = sphi 0, %s40
    %s44 = sphi 0, %s43
    %s60 = sphi 0, %s44
    %s68 = sphi 0, %s70
    %s71 = sphi 0, %s68
    %s72 = sphi 0, %s71
    %s88 = sphi 0, %s72
    %s94 = sphi 0, %s96
    %s97 = sphi 0, %s94
    %s98 = sphi 0, %s97
    %s114 = sphi 0, %s98
    %s122 = sphi 0, %s124
    %s125 = sphi 0, %s122
    %s126 = sphi 0, %s125
    %s142 = sphi 0, %s126
  $region4: #{gnn_forward.6} parent=0 // loop_header_branch
    %12 = sbr.rel (%p10) target = $region8
  $region5: #{gnn_forward.6} parent=0 // loop_body
    %s14 = ssub.s32 %s9, 1
    %s15 = ssub.s32 %s9, 2
    %s25 = sadd.s32 1, %s18
    %p26 = scmp.ge.s32.totalorder %s25, 1
    %s27 = scalar_select %p26, 0, %s25
    %s28 = sadd.s32 1, %s17
    %s29 = scalar_select %p26, %s28, %s17
    %p30 = scmp.ge.s32.totalorder %s29, 1
    %s31 = scalar_select %p30, 0, %s29
    %s32 = sadd.s32 1, %s16
    %s33 = scalar_select %p30, %s32, %s16
    %p34 = scmp.ge.s32.totalorder %s33, 2
    %s35 = scalar_select %p34, 0, %s33
    %s36 = ssub.s32 %s16, %s35
    %s37 = ssub.s32 %s18, %s27
    %s38 = sor.u32 %s36, %s37
    %p39 = scmp.eq.s32.totalorder %s38, 0
    %s41 = sadd.s32 %s40, 1
    %s42 = scalar_select %p39, %s40, %s41
    %p45 = pneg %p39
    %p46 = scmp.eq.s32.totalorder %s9, 1
    %p47 = por %p45, %p46
    %p48 = scmp.ne.s32.totalorder %s40, %s43
    %p49 = scmp.eq.s32.totalorder %s9, 0
    %p50 = por %p48, %p49
    %p51 = scmp.ne.s32.totalorder %s40, %s43
    %p52 = scmp.eq.s32.totalorder %s14, 1
    %p53 = por %p51, %p52
    %p54 = scmp.ne.s32.totalorder %s43, %s44
    %p55 = scmp.eq.s32.totalorder %s14, 0
    %p56 = por %p54, %p55
    %p57 = scmp.ne.s32.totalorder %s43, %s44
    %p58 = scmp.eq.s32.totalorder %s15, 1
    %p59 = por %p57, %p58
    %p61 = scmp.ne.s32.totalorder %s44, %s60
    %p62 = scmp.eq.s32.totalorder %s15, 0
    %p63 = por %p61, %p62
    %s64 = ssub.s32 %s18, %s27
    %s65 = ssub.s32 %s17, %s31
    %s66 = sor.u32 %s64, %s65
    %p67 = scmp.eq.s32.totalorder %s66, 0
    %s69 = sadd.s32 %s68, 1
    %s70 = scalar_select %p67, %s68, %s69
    %p73 = pneg %p67
    %p74 = scmp.eq.s32.totalorder %s9, 1
    %p75 = por %p73, %p74
    %p76 = scmp.ne.s32.totalorder %s68, %s71
    %p77 = scmp.eq.s32.totalorder %s9, 0
    %p78 = por %p76, %p77
    %p79 = scmp.ne.s32.totalorder %s68, %s71
    %p80 = scmp.eq.s32.totalorder %s14, 1
    %p81 = por %p79, %p80
    %p82 = scmp.ne.s32.totalorder %s71, %s72
    %p83 = scmp.eq.s32.totalorder %s14, 0
    %p84 = por %p82, %p83
    %p85 = scmp.ne.s32.totalorder %s71, %s72
    %p86 = scmp.eq.s32.totalorder %s15, 1
    %p87 = por %p85, %p86
    %p89 = scmp.ne.s32.totalorder %s72, %s88
    %p90 = scmp.eq.s32.totalorder %s15, 0
    %p91 = por %p89, %p90
    %s92 = ssub.s32 %s17, %s31
    %p93 = scmp.eq.s32.totalorder %s92, 0
    %s95 = sadd.s32 %s94, 1
    %s96 = scalar_select %p93, %s94, %s95
    %p99 = pneg %p93
    %p100 = scmp.eq.s32.totalorder %s9, 1
    %p101 = por %p99, %p100
    %p102 = scmp.ne.s32.totalorder %s94, %s97
    %p103 = scmp.eq.s32.totalorder %s9, 0
    %p104 = por %p102, %p103
    %p105 = scmp.ne.s32.totalorder %s94, %s97
    %p106 = scmp.eq.s32.totalorder %s14, 1
    %p107 = por %p105, %p106
    %p108 = scmp.ne.s32.totalorder %s97, %s98
    %p109 = scmp.eq.s32.totalorder %s14, 0
    %p110 = por %p108, %p109
    %p111 = scmp.ne.s32.totalorder %s97, %s98
    %p112 = scmp.eq.s32.totalorder %s15, 1
    %p113 = por %p111, %p112
    %p115 = scmp.ne.s32.totalorder %s98, %s114
    %p116 = scmp.eq.s32.totalorder %s15, 0
    %p117 = por %p115, %p116
    %s118 = ssub.s32 %s16, %s35
    %s119 = ssub.s32 %s17, %s31
    %s120 = sor.u32 %s118, %s119
    %p121 = scmp.eq.s32.totalorder %s120, 0
    %s123 = sadd.s32 %s122, 1
    %s124 = scalar_select %p121, %s122, %s123
    %p127 = pneg %p121
    %p128 = scmp.eq.s32.totalorder %s9, 1
    %p129 = por %p127, %p128
    %p130 = scmp.ne.s32.totalorder %s122, %s125
    %p131 = scmp.eq.s32.totalorder %s9, 0
    %p132 = por %p130, %p131
    %p133 = scmp.ne.s32.totalorder %s122, %s125
    %p134 = scmp.eq.s32.totalorder %s14, 1
    %p135 = por %p133, %p134
    %p136 = scmp.ne.s32.totalorder %s125, %s126
    %p137 = scmp.eq.s32.totalorder %s14, 0
    %p138 = por %p136, %p137
    %p139 = scmp.ne.s32.totalorder %s125, %s126
    %p140 = scmp.eq.s32.totalorder %s15, 1
    %p141 = por %p139, %p140
    %p143 = scmp.ne.s32.totalorder %s126, %s142
    %p144 = scmp.eq.s32.totalorder %s15, 0
    %p145 = por %p143, %p144
    %p146 = scmp.le.s32.totalorder 1, %s9
    %p147 = scmp.lt.s32.totalorder %s9, 3
    %p148 = pnand %p146, %p147
    %p149 = pneg %p148
    // Predicated region
    $region9: #{gnn_forward.6} parent=5 // pred_check
      _
    $region10: #{gnn_forward.6} parent=5 // pred_check_branch
      %151 = sbr.rel (%p148) target = $region12
    $region11: #{gnn_forward.6} parent=5 // pred_region
      %s152 = ssub.s32 %s9, 1
      // Predicated region
      $region13: #{gnn_forward.6} parent=11 // pred_check
        %p153 = pneg %p84
      $region14: #{gnn_forward.6} parent=11 // pred_check_branch
        %155 = sbr.rel (%p153) target = $region16
      $region15: #{gnn_forward.6} parent=11 // pred_region
        %s156 = smul.u32 16, %s21
        %p157 = scmp.lt.s32.totalorder %s156, 15
        %s158 = scalar_select %p157, %s156, 15
        %p159 = scmp.lt.s32.totalorder %s20, 0
        %s160 = scalar_select %p159, %s20, 0
        %s161 = sadd.s32 %s160, %s158
        %s162 = smul.addr %s161, 4
        %s163 = scalar_lea.vmem %s1, %s162
        %s164 = smul.u32 16, %s21
      $region16: #{gnn_forward.6} parent=11 // pred_fallthru
        _
      // Predicated region
      $region17: #{gnn_forward.6} parent=11 // pred_check
        %p165 = pneg %p110
      $region18: #{gnn_forward.6} parent=11 // pred_check_branch
        %167 = sbr.rel (%p165) target = $region20
      $region19: #{gnn_forward.6} parent=11 // pred_region
        %p168 = scmp.lt.s32.totalorder %s20, 0
        %s169 = scalar_select %p168, %s20, 0
        %s170 = scalar_lea.vmem %s2, %s169
      $region20: #{gnn_forward.6} parent=11 // pred_fallthru
        _
    $region12: #{gnn_forward.6} parent=5 // pred_fallthru
      _
    %p171 = scmp.lt.s32.totalorder %s9, 2
    // Predicated region
    $region21: #{gnn_forward.6} parent=5 // pred_check
      %p172 = pneg %p171
    $region22: #{gnn_forward.6} parent=5 // pred_check_branch
      %174 = sbr.rel (%p172) target = $region24
    $region23: #{gnn_forward.6} parent=5 // pred_region
      // Predicated region
      $region25: #{gnn_forward.6} parent=23 // pred_check
        %p175 = pneg %p50
      $region26: #{gnn_forward.6} parent=23 // pred_check_branch
        %177 = sbr.rel (%p175) target = $region28
      $region27: #{gnn_forward.6} parent=23 // pred_region
        %s178 = smul.u32 16, %s16
        %p179 = scmp.lt.s32.totalorder %s178, 31
        %s180 = scalar_select %p179, %s178, 31
        %p181 = scmp.lt.s32.totalorder %s18, 0
        %s182 = scalar_select %p181, %s18, 0
        %s183 = sadd.s32 %s182, %s180
        %s184 = smul.addr %s183, 4
        %s185 = scalar_lea.vmem %s0, %s184
        %s186 = smul.u32 16, %s16
      $region28: #{gnn_forward.6} parent=23 // pred_fallthru
        _
    $region24: #{gnn_forward.6} parent=5 // pred_fallthru
      _
    %p187 = scmp.le.s32.totalorder 1, %s9
    %p188 = scmp.lt.s32.totalorder %s9, 3
    %p189 = pnand %p187, %p188
    %p190 = pneg %p189
    // Predicated region
    $region29: #{gnn_forward.6} parent=5 // pred_check
      _
    $region30: #{gnn_forward.6} parent=5 // pred_check_branch
      %192 = sbr.rel (%p189) target = $region32
    $region31: #{gnn_forward.6} parent=5 // pred_region
      %s193 = ssub.s32 %s9, 1
      %s194 = smul.u32 16, %s19
      %p195 = scmp.lt.s32.totalorder %s194, 31
      %s196 = scalar_select %p195, %s194, 31
      %p197 = scmp.lt.s32.totalorder %s21, 0
      %s198 = scalar_select %p197, %s21, 0
      %s199 = sadd.s32 %s198, %s196
      %s200 = smul.addr %s199, 4
      %s201 = scalar_lea.vmem %s0, %s200
      %p202 = pneg %p56
      %p203 = pneg %p53
      %s204 = smul.u32 16, %s21
      %p205 = scmp.lt.s32.totalorder %s204, 15
      %s206 = scalar_select %p205, %s204, 15
      %p207 = scmp.lt.s32.totalorder %s20, 0
      %s208 = scalar_select %p207, %s20, 0
      %s209 = sadd.s32 %s208, %s206
      %s210 = smul.addr %s209, 4
      %s211 = scalar_lea.vmem %s1, %s210
      %p212 = pneg %p84
      %p213 = pneg %p81
      %p214 = scmp.lt.s32.totalorder %s20, 0
      %s215 = scalar_select %p214, %s20, 0
      %s216 = scalar_lea.vmem %s2, %s215
      %p217 = pneg %p110
      %p218 = pneg %p107
      %p219 = pneg %p138
      %p220 = pneg %p135
      %s221 = smul.u32 16, %s19
      %p222 = scmp.lt.s32.totalorder %s221, 31
      %s223 = scalar_select %p222, %s221, 31
      %p224 = scmp.lt.s32.totalorder %s20, 0
      %s225 = scalar_select %p224, %s20, 0
      %s226 = sadd.s32 %s225, %s223
      %s227 = smul.addr %s226, 4
      %s228 = scalar_lea.vmem %s3, %s227
      %s229 = smul.u32 16, %s19
      %p230 = scmp.lt.s32.totalorder %s229, 31
      %s231 = scalar_select %p230, %s229, 31
      %p232 = scmp.lt.s32.totalorder %s21, 0
      %s233 = scalar_select %p232, %s21, 0
      %s234 = sadd.s32 %s233, %s231
      %s235 = smul.addr %s234, 4
      %s236 = scalar_lea.vmem %s0, %s235
      %s237 = smul.u32 16, %s19
      %s238 = smul.u32 16, %s21
      %p239 = scmp.lt.s32.totalorder %s238, 15
      %s240 = scalar_select %p239, %s238, 15
      %p241 = scmp.lt.s32.totalorder %s20, 0
      %s242 = scalar_select %p241, %s20, 0
      %s243 = sadd.s32 %s242, %s240
      %s244 = smul.addr %s243, 4
      %s245 = scalar_lea.vmem %s1, %s244
      %s246 = smul.u32 16, %s21
      %p247 = scmp.lt.s32.totalorder %s20, 0
      %s248 = scalar_select %p247, %s20, 0
      %s249 = scalar_lea.vmem %s2, %s248
      %s250 = smul.u32 16, %s19
      %p251 = scmp.lt.s32.totalorder %s250, 31
      %s252 = scalar_select %p251, %s250, 31
      %p253 = scmp.lt.s32.totalorder %s20, 0
      %s254 = scalar_select %p253, %s20, 0
      %s255 = sadd.s32 %s254, %s252
      %s256 = smul.addr %s255, 4
      %s257 = scalar_lea.vmem %s3, %s256
      %s258 = smul.u32 16, %s19
      %p260 = scmp.eq.s32.totalorder %s21, 0
      // Predicated region
      $region33: #{gnn_forward.6} parent=31 // pred_check
        %p261 = pneg %p260
      $region34: #{gnn_forward.6} parent=31 // pred_check_branch
        %263 = sbr.rel (%p261) target = $region36
      $region35: #{gnn_forward.6} parent=31 // pred_region
        %264 = vst [vmem:[#allocation2] sm:$0xff] 0.0
        %265 = vst [vmem:[#allocation2 + $0x8] sm:$0xff] 0.0
        %266 = vst [vmem:[#allocation2 + $0x10] sm:$0xff] 0.0
        %267 = vst [vmem:[#allocation2 + $0x18] sm:$0xff] 0.0
        %268 = vst [vmem:[#allocation2 + $0x20] sm:$0xff] 0.0
        %269 = vst [vmem:[#allocation2 + $0x28] sm:$0xff] 0.0
        %270 = vst [vmem:[#allocation2 + $0x30] sm:$0xff] 0.0
        %271 = vst [vmem:[#allocation2 + $0x38] sm:$0xff] 0.0
        %272 = vst [vmem:[#allocation2 + $0x40] sm:$0xff] 0.0
        %273 = vst [vmem:[#allocation2 + $0x48] sm:$0xff] 0.0
        %274 = vst [vmem:[#allocation2 + $0x50] sm:$0xff] 0.0
        %275 = vst [vmem:[#allocation2 + $0x58] sm:$0xff] 0.0
        %276 = vst [vmem:[#allocation2 + $0x60] sm:$0xff] 0.0
        %277 = vst [vmem:[#allocation2 + $0x68] sm:$0xff] 0.0
        %278 = vst [vmem:[#allocation2 + $0x70] sm:$0xff] 0.0
        %279 = vst [vmem:[#allocation2 + $0x78] sm:$0xff] 0.0
      $region36: #{gnn_forward.6} parent=31 // pred_fallthru
        _
      %v280 = vld [vmem:[#allocation2] sm:$0xff]
      %v281 = vld [vmem:[#allocation2 + $0x8] sm:$0xff]
      %v282 = vld [vmem:[#allocation2 + $0x10] sm:$0xff]
      %v283 = vld [vmem:[#allocation2 + $0x18] sm:$0xff]
      %v284 = vld [vmem:[#allocation2 + $0x20] sm:$0xff]
      %v285 = vld [vmem:[#allocation2 + $0x28] sm:$0xff]
      %v286 = vld [vmem:[#allocation2 + $0x30] sm:$0xff]
      %v287 = vld [vmem:[#allocation2 + $0x38] sm:$0xff]
      %v288 = vld [vmem:[#allocation2 + $0x40] sm:$0xff]
      %v289 = vld [vmem:[#allocation2 + $0x48] sm:$0xff]
      %v290 = vld [vmem:[#allocation2 + $0x50] sm:$0xff]
      %v291 = vld [vmem:[#allocation2 + $0x58] sm:$0xff]
      %v292 = vld [vmem:[#allocation2 + $0x60] sm:$0xff]
      %v293 = vld [vmem:[#allocation2 + $0x68] sm:$0xff]
      %v294 = vld [vmem:[#allocation2 + $0x70] sm:$0xff]
      %v295 = vld [vmem:[#allocation2 + $0x78] sm:$0xff]
      %v296 = vld [vmem:[%s236] sm:$0xf]
      %v297 = vld [vmem:[%s236 + $0x4] sm:$0xf]
      %v298 = vld [vmem:[%s236 + $0x8] sm:$0xf]
      %v299 = vld [vmem:[%s236 + $0xc] sm:$0xf]
      %v300 = vld [vmem:[%s236 + $0x10] sm:$0xf]
      %v301 = vld [vmem:[%s236 + $0x14] sm:$0xf]
      %v302 = vld [vmem:[%s236 + $0x18] sm:$0xf]
      %v303 = vld [vmem:[%s236 + $0x1c] sm:$0xf]
      %v304 = vld [vmem:[%s236 + $0x20] sm:$0xf]
      %v305 = vld [vmem:[%s236 + $0x24] sm:$0xf]
      %v306 = vld [vmem:[%s236 + $0x28] sm:$0xf]
      %v307 = vld [vmem:[%s236 + $0x2c] sm:$0xf]
      %v308 = vld [vmem:[%s236 + $0x30] sm:$0xf]
      %v309 = vld [vmem:[%s236 + $0x34] sm:$0xf]
      %v310 = vld [vmem:[%s236 + $0x38] sm:$0xf]
      %v311 = vld [vmem:[%s236 + $0x3c] sm:$0xf]
      %v312 = vld [vmem:[%s245] sm:$0xf]
      %v313 = vld [vmem:[%s245 + $0x4] sm:$0xf]
      %v314 = vld [vmem:[%s245 + $0x8] sm:$0xf]
      %v315 = vld [vmem:[%s245 + $0xc] sm:$0xf]
      %v316 = vld [vmem:[%s245 + $0x10] sm:$0xf]
      %v317 = vld [vmem:[%s245 + $0x14] sm:$0xf]
      %v318 = vld [vmem:[%s245 + $0x18] sm:$0xf]
      %v319 = vld [vmem:[%s245 + $0x1c] sm:$0xf]
      %v320 = vld [vmem:[%s245 + $0x20] sm:$0xf]
      %v321 = vld [vmem:[%s245 + $0x24] sm:$0xf]
      %v322 = vld [vmem:[%s245 + $0x28] sm:$0xf]
      %v323 = vld [vmem:[%s245 + $0x2c] sm:$0xf]
      %v324 = vld [vmem:[%s245 + $0x30] sm:$0xf]
      %v325 = vld [vmem:[%s245 + $0x34] sm:$0xf]
      %v326 = vld [vmem:[%s245 + $0x38] sm:$0xf]
      %v327 = vld [vmem:[%s245 + $0x3c] sm:$0xf]
      %v344 = vunpack.c.l.b16 %v296
      %v345 = vunpack.c.l.b16 %v297
      %v346 = vunpack.c.l.b16 %v298
      %v347 = vunpack.c.l.b16 %v299
      %v348 = vunpack.c.l.b16 %v300
      %v349 = vunpack.c.l.b16 %v301
      %v350 = vunpack.c.l.b16 %v302
      %v351 = vunpack.c.l.b16 %v303
      %v352 = vunpack.c.l.b16 %v304
      %v353 = vunpack.c.l.b16 %v305
      %v354 = vunpack.c.l.b16 %v306
      %v355 = vunpack.c.l.b16 %v307
      %v356 = vunpack.c.l.b16 %v308
      %v357 = vunpack.c.l.b16 %v309
      %v358 = vunpack.c.l.b16 %v310
      %v359 = vunpack.c.l.b16 %v311
      %v360 = vpack.c.b16 %v345, %v344
      %v361 = vpack.c.b16 %v347, %v346
      %v362 = vpack.c.b16 %v349, %v348
      %v363 = vpack.c.b16 %v351, %v350
      %v364 = vpack.c.b16 %v353, %v352
      %v365 = vpack.c.b16 %v355, %v354
      %v366 = vpack.c.b16 %v357, %v356
      %v367 = vpack.c.b16 %v359, %v358
      %v392 = vunpack.c.l.b16 %v312
      %v393 = vunpack.c.l.b16 %v313
      %v394 = vunpack.c.l.b16 %v314
      %v395 = vunpack.c.l.b16 %v315
      %v396 = vunpack.c.l.b16 %v316
      %v397 = vunpack.c.l.b16 %v317
      %v398 = vunpack.c.l.b16 %v318
      %v399 = vunpack.c.l.b16 %v319
      %v400 = vunpack.c.l.b16 %v320
      %v401 = vunpack.c.l.b16 %v321
      %v402 = vunpack.c.l.b16 %v322
      %v403 = vunpack.c.l.b16 %v323
      %v404 = vunpack.c.l.b16 %v324
      %v405 = vunpack.c.l.b16 %v325
      %v406 = vunpack.c.l.b16 %v326
      %v407 = vunpack.c.l.b16 %v327
      %v408 = vpack.c.b16 %v393, %v392
      %v409 = vpack.c.b16 %v395, %v394
      %v410 = vpack.c.b16 %v397, %v396
      %v411 = vpack.c.b16 %v399, %v398
      %v412 = vpack.c.b16 %v401, %v400
      %v413 = vpack.c.b16 %v403, %v402
      %v414 = vpack.c.b16 %v405, %v404
      %v415 = vpack.c.b16 %v407, %v406
      %424 = vmatprep.subr.bf16.mxu0 0
      %425 = vmatpush1.bf16.msra.mxu0 %v415
      %426 = vmatprep.subr.bf16.mxu0 0
      %427 = vmatpush1.bf16.msra.mxu0 %v414
      %428 = vmatprep.subr.bf16.mxu0 0
      %429 = vmatpush1.bf16.msra.mxu0 %v413
      %430 = vmatprep.subr.bf16.mxu0 0
      %431 = vmatpush1.bf16.msra.mxu0 %v412
      %432 = vmatprep.subr.bf16.mxu0 0
      %433 = vmatpush1.bf16.msra.mxu0 %v411
      %434 = vmatprep.subr.bf16.mxu0 0
      %435 = vmatpush1.bf16.msra.mxu0 %v410
      %436 = vmatprep.subr.bf16.mxu0 0
      %437 = vmatpush1.bf16.msra.mxu0 %v409
      %438 = vmatprep.subr.bf16.mxu0 0
      %439 = vmatpush1.bf16.msra.mxu0 %v408
      %440 = vmatprep.subr.bf16.mxu0 0
      %441 = vmatpush2.bf16.msra.mxu0 0
      %442 = vmatprep.subr.bf16.mxu0 0
      %443 = vmatpush2.bf16.msra.mxu0 0
      %444 = vmatprep.subr.bf16.mxu0 0
      %445 = vmatpush2.bf16.msra.mxu0 0
      %446 = vmatprep.subr.bf16.mxu0 0
      %447 = vmatpush2.bf16.msra.mxu0 0
      %448 = vmatprep.subr.bf16.mxu0 0
      %449 = vmatpush2.bf16.msra.mxu0 0
      %450 = vmatprep.subr.bf16.mxu0 0
      %451 = vmatpush2.bf16.msra.mxu0 0
      %452 = vmatprep.subr.bf16.mxu0 0
      %453 = vmatpush2.bf16.msra.mxu0 0
      %454 = vmatprep.subr.bf16.mxu0 0
      %455 = vmatpush2.bf16.msra.mxu0 0
      %456 = vmatprep.mubr.bf16.mxu0 0
      %457 = vmatmul.mubr.bf16.gmra.mxu0 %v360
      %v458 = vpop.f32.mrf.mxu0
      %v459 = vadd.f32 0.0, %v458
      %v460 = vpop.f32.mrf.mxu0
      %v461 = vpop.f32.mrf.mxu0
      %v462 = vadd.f32 0.0, %v461
      %v463 = vpop.f32.mrf.mxu0
      %464 = vmatprep.mubr.bf16.mxu0 0
      %465 = vmatmul.mubr.bf16.gmra.mxu0 %v361
      %v466 = vpop.f32.mrf.mxu0
      %v467 = vadd.f32 0.0, %v466
      %v468 = vpop.f32.mrf.mxu0
      %v469 = vpop.f32.mrf.mxu0
      %v470 = vadd.f32 0.0, %v469
      %v471 = vpop.f32.mrf.mxu0
      %472 = vmatprep.mubr.bf16.mxu0 0
      %473 = vmatmul.mubr.bf16.gmra.mxu0 %v362
      %v474 = vpop.f32.mrf.mxu0
      %v475 = vadd.f32 0.0, %v474
      %v476 = vpop.f32.mrf.mxu0
      %v477 = vpop.f32.mrf.mxu0
      %v478 = vadd.f32 0.0, %v477
      %v479 = vpop.f32.mrf.mxu0
      %480 = vmatprep.mubr.bf16.mxu0 0
      %481 = vmatmul.mubr.bf16.gmra.mxu0 %v363
      %v482 = vpop.f32.mrf.mxu0
      %v483 = vadd.f32 0.0, %v482
      %v484 = vpop.f32.mrf.mxu0
      %v485 = vpop.f32.mrf.mxu0
      %v486 = vadd.f32 0.0, %v485
      %v487 = vpop.f32.mrf.mxu0
      %488 = vmatprep.mubr.bf16.mxu0 0
      %489 = vmatmul.mubr.bf16.gmra.mxu0 %v364
      %v490 = vpop.f32.mrf.mxu0
      %v491 = vadd.f32 0.0, %v490
      %v492 = vpop.f32.mrf.mxu0
      %v493 = vpop.f32.mrf.mxu0
      %v494 = vadd.f32 0.0, %v493
      %v495 = vpop.f32.mrf.mxu0
      %496 = vmatprep.mubr.bf16.mxu0 0
      %497 = vmatmul.mubr.bf16.gmra.mxu0 %v365
      %v498 = vpop.f32.mrf.mxu0
      %v499 = vadd.f32 0.0, %v498
      %v500 = vpop.f32.mrf.mxu0
      %v501 = vpop.f32.mrf.mxu0
      %v502 = vadd.f32 0.0, %v501
      %v503 = vpop.f32.mrf.mxu0
      %504 = vmatprep.mubr.bf16.mxu0 0
      %505 = vmatmul.mubr.bf16.gmra.mxu0 %v366
      %v506 = vpop.f32.mrf.mxu0
      %v507 = vadd.f32 0.0, %v506
      %v508 = vpop.f32.mrf.mxu0
      %v509 = vpop.f32.mrf.mxu0
      %v510 = vadd.f32 0.0, %v509
      %v511 = vpop.f32.mrf.mxu0
      %512 = vmatprep.mubr.bf16.mxu0 0
      %513 = vmatmul.mubr.bf16.gmra.mxu0 %v367
      %v514 = vpop.f32.mrf.mxu0
      %v515 = vadd.f32 0.0, %v514
      %v516 = vpop.f32.mrf.mxu0
      %v517 = vpop.f32.mrf.mxu0
      %v518 = vadd.f32 0.0, %v517
      %v519 = vpop.f32.mrf.mxu0
      %520 = vdwg.mxu0
      %v521 = vadd.f32 %v280, %v459
      %v522 = vadd.f32 %v281, %v462
      %v523 = vadd.f32 %v282, %v467
      %v524 = vadd.f32 %v283, %v470
      %v525 = vadd.f32 %v284, %v475
      %v526 = vadd.f32 %v285, %v478
      %v527 = vadd.f32 %v286, %v483
      %v528 = vadd.f32 %v287, %v486
      %v529 = vadd.f32 %v288, %v491
      %v530 = vadd.f32 %v289, %v494
      %v531 = vadd.f32 %v290, %v499
      %v532 = vadd.f32 %v291, %v502
      %v533 = vadd.f32 %v292, %v507
      %v534 = vadd.f32 %v293, %v510
      %v535 = vadd.f32 %v294, %v515
      %v536 = vadd.f32 %v295, %v518
      %537 = vst [vmem:[#allocation2] sm:$0xff] %v521
      %538 = vst [vmem:[#allocation2 + $0x8] sm:$0xff] %v522
      %539 = vst [vmem:[#allocation2 + $0x10] sm:$0xff] %v523
      %540 = vst [vmem:[#allocation2 + $0x18] sm:$0xff] %v524
      %541 = vst [vmem:[#allocation2 + $0x20] sm:$0xff] %v525
      %542 = vst [vmem:[#allocation2 + $0x28] sm:$0xff] %v526
      %543 = vst [vmem:[#allocation2 + $0x30] sm:$0xff] %v527
      %544 = vst [vmem:[#allocation2 + $0x38] sm:$0xff] %v528
      %545 = vst [vmem:[#allocation2 + $0x40] sm:$0xff] %v529
      %546 = vst [vmem:[#allocation2 + $0x48] sm:$0xff] %v530
      %547 = vst [vmem:[#allocation2 + $0x50] sm:$0xff] %v531
      %548 = vst [vmem:[#allocation2 + $0x58] sm:$0xff] %v532
      %549 = vst [vmem:[#allocation2 + $0x60] sm:$0xff] %v533
      %550 = vst [vmem:[#allocation2 + $0x68] sm:$0xff] %v534
      %551 = vst [vmem:[#allocation2 + $0x70] sm:$0xff] %v535
      %552 = vst [vmem:[#allocation2 + $0x78] sm:$0xff] %v536
      // Predicated region
      $region37: #{gnn_forward.6} parent=31 // pred_check
        %p553 = pneg %p260
      $region38: #{gnn_forward.6} parent=31 // pred_check_branch
        %555 = sbr.rel (%p553) target = $region40
      $region39: #{gnn_forward.6} parent=31 // pred_region
        %v556 = vld [vmem:[#allocation2] sm:$0xff]
        %v557 = vld [vmem:[#allocation2 + $0x8] sm:$0xff]
        %v558 = vld [vmem:[#allocation2 + $0x10] sm:$0xff]
        %v559 = vld [vmem:[#allocation2 + $0x18] sm:$0xff]
        %v560 = vld [vmem:[#allocation2 + $0x20] sm:$0xff]
        %v561 = vld [vmem:[#allocation2 + $0x28] sm:$0xff]
        %v562 = vld [vmem:[#allocation2 + $0x30] sm:$0xff]
        %v563 = vld [vmem:[#allocation2 + $0x38] sm:$0xff]
        %v564 = vld [vmem:[#allocation2 + $0x40] sm:$0xff]
        %v565 = vld [vmem:[#allocation2 + $0x48] sm:$0xff]
        %v566 = vld [vmem:[#allocation2 + $0x50] sm:$0xff]
        %v567 = vld [vmem:[#allocation2 + $0x58] sm:$0xff]
        %v568 = vld [vmem:[#allocation2 + $0x60] sm:$0xff]
        %v569 = vld [vmem:[#allocation2 + $0x68] sm:$0xff]
        %v570 = vld [vmem:[#allocation2 + $0x70] sm:$0xff]
        %v571 = vld [vmem:[#allocation2 + $0x78] sm:$0xff]
        %v572 = vld [vmem:[%s249] sm:$0x1]
        %v574 = vlaneseq
        %v575 = vshrl.u32 %v574, 7
        %v576 = vsub.s32 0, %v575
        %v577 = vrot.slane %v572, %v576
        %v579 = vadd.f32 %v556, %v577
        %v580 = vadd.f32 %v557, %v577
        %v581 = vadd.f32 %v558, %v577
        %v582 = vadd.f32 %v559, %v577
        %v583 = vadd.f32 %v560, %v577
        %v584 = vadd.f32 %v561, %v577
        %v585 = vadd.f32 %v562, %v577
        %v586 = vadd.f32 %v563, %v577
        %v587 = vadd.f32 %v564, %v577
        %v588 = vadd.f32 %v565, %v577
        %v589 = vadd.f32 %v566, %v577
        %v590 = vadd.f32 %v567, %v577
        %v591 = vadd.f32 %v568, %v577
        %v592 = vadd.f32 %v569, %v577
        %v593 = vadd.f32 %v570, %v577
        %v594 = vadd.f32 %v571, %v577
        %v595 = vpack.c.bf16 %v580, %v579
        %v596 = vpack.c.bf16 %v582, %v581
        %v597 = vpack.c.bf16 %v584, %v583
        %v598 = vpack.c.bf16 %v586, %v585
        %v599 = vpack.c.bf16 %v588, %v587
        %v600 = vpack.c.bf16 %v590, %v589
        %v601 = vpack.c.bf16 %v592, %v591
        %v602 = vpack.c.bf16 %v594, %v593
        %v611 = vunpack.c.l.b16 %v595
        %v612 = vunpack.c.h.b16 %v595
        %v613 = vunpack.c.l.b16 %v596
        %v614 = vunpack.c.h.b16 %v596
        %v615 = vunpack.c.l.b16 %v597
        %v616 = vunpack.c.h.b16 %v597
        %v617 = vunpack.c.l.b16 %v598
        %v618 = vunpack.c.h.b16 %v598
        %v619 = vunpack.c.l.b16 %v599
        %v620 = vunpack.c.h.b16 %v599
        %v621 = vunpack.c.l.b16 %v600
        %v622 = vunpack.c.h.b16 %v600
        %v623 = vunpack.c.l.b16 %v601
        %v624 = vunpack.c.h.b16 %v601
        %v625 = vunpack.c.l.b16 %v602
        %v626 = vunpack.c.h.b16 %v602
        %v627 = vpack.c.b16 %v611, %v611
        %v628 = vpack.c.b16 %v612, %v612
        %v629 = vpack.c.b16 %v613, %v613
        %v630 = vpack.c.b16 %v614, %v614
        %v631 = vpack.c.b16 %v615, %v615
        %v632 = vpack.c.b16 %v616, %v616
        %v633 = vpack.c.b16 %v617, %v617
        %v634 = vpack.c.b16 %v618, %v618
        %v635 = vpack.c.b16 %v619, %v619
        %v636 = vpack.c.b16 %v620, %v620
        %v637 = vpack.c.b16 %v621, %v621
        %v638 = vpack.c.b16 %v622, %v622
        %v639 = vpack.c.b16 %v623, %v623
        %v640 = vpack.c.b16 %v624, %v624
        %v641 = vpack.c.b16 %v625, %v625
        %v642 = vpack.c.b16 %v626, %v626
        %659 = vst [vmem:[%s257] sm:$0xf] %v627
        %660 = vst [vmem:[%s257 + $0x4] sm:$0xf] %v628
        %661 = vst [vmem:[%s257 + $0x8] sm:$0xf] %v629
        %662 = vst [vmem:[%s257 + $0xc] sm:$0xf] %v630
        %663 = vst [vmem:[%s257 + $0x10] sm:$0xf] %v631
        %664 = vst [vmem:[%s257 + $0x14] sm:$0xf] %v632
        %665 = vst [vmem:[%s257 + $0x18] sm:$0xf] %v633
        %666 = vst [vmem:[%s257 + $0x1c] sm:$0xf] %v634
        %667 = vst [vmem:[%s257 + $0x20] sm:$0xf] %v635
        %668 = vst [vmem:[%s257 + $0x24] sm:$0xf] %v636
        %669 = vst [vmem:[%s257 + $0x28] sm:$0xf] %v637
        %670 = vst [vmem:[%s257 + $0x2c] sm:$0xf] %v638
        %671 = vst [vmem:[%s257 + $0x30] sm:$0xf] %v639
        %672 = vst [vmem:[%s257 + $0x34] sm:$0xf] %v640
        %673 = vst [vmem:[%s257 + $0x38] sm:$0xf] %v641
        %674 = vst [vmem:[%s257 + $0x3c] sm:$0xf] %v642
      $region40: #{gnn_forward.6} parent=31 // pred_fallthru
        _
      %s675 = smul.u32 16, %s19
      %p676 = scmp.lt.s32.totalorder %s675, 31
      %s677 = scalar_select %p676, %s675, 31
      %p678 = scmp.lt.s32.totalorder %s20, 0
      %s679 = scalar_select %p678, %s20, 0
      %s680 = sadd.s32 %s679, %s677
      %s681 = smul.addr %s680, 4
      %s682 = scalar_lea.vmem %s3, %s681
      // Predicated region
      $region41: #{gnn_forward.6} parent=31 // pred_check
        %p683 = pneg %p135
      $region42: #{gnn_forward.6} parent=31 // pred_check_branch
        %685 = sbr.rel (%p683) target = $region44
      $region43: #{gnn_forward.6} parent=31 // pred_region
        %s686 = smul.u32 16, %s19
      $region44: #{gnn_forward.6} parent=31 // pred_fallthru
        _
    $region32: #{gnn_forward.6} parent=5 // pred_fallthru
      _
    %p687 = scmp.le.s32.totalorder 2, %s9
    // Predicated region
    $region45: #{gnn_forward.6} parent=5 // pred_check
      %p688 = pneg %p687
    $region46: #{gnn_forward.6} parent=5 // pred_check_branch
      %690 = sbr.rel (%p688) target = $region48
    $region47: #{gnn_forward.6} parent=5 // pred_region
      %s691 = ssub.s32 %s9, 2
      // Predicated region
      $region49: #{gnn_forward.6} parent=47 // pred_check
        %p692 = pneg %p141
      $region50: #{gnn_forward.6} parent=47 // pred_check_branch
        %694 = sbr.rel (%p692) target = $region52
      $region51: #{gnn_forward.6} parent=47 // pred_region
        %s695 = smul.u32 16, %s22
        %p696 = scmp.lt.s32.totalorder %s695, 31
        %s697 = scalar_select %p696, %s695, 31
        %p698 = scmp.lt.s32.totalorder %s23, 0
        %s699 = scalar_select %p698, %s23, 0
        %s700 = sadd.s32 %s699, %s697
        %s701 = smul.addr %s700, 4
        %s702 = scalar_lea.vmem %s3, %s701
      $region52: #{gnn_forward.6} parent=47 // pred_fallthru
        _
    $region48: #{gnn_forward.6} parent=5 // pred_fallthru
      _
  $region6: #{gnn_forward.6} parent=0 // loop_footer
    %s13 = sadd.s32 1, %s9
  $region7: #{gnn_forward.6} parent=0 // loop_footer_branch
    %8 = sbr.rel target = $region3
  $region8: #{gnn_forward.6} parent=0 // loop_exit
    _

// kernel: gnn_forward.11
$region0: #{gnn_forward.11}
  #allocation0 [shape = 'u32[]', space=smem, size = 0x4, offset = 0x4, fixed_abs, tag = 'smem constant byte address 0x4 - core index']
  #allocation1 [shape = 'u32[144,128]{1,0:T(1,128)}', space=vmem, size = 0x12000, scoped, tag = 'internal scratch']
  #allocation2 [shape = 'f32[128,128]{1,0:T(8,128)}', space=vmem, size = 0x10000, scoped, tag = 'scratch operand']
  %s0 = inlined_call_operand.vmem [shape: bf16[256,256], index: 0, kind: input, shape index: {}]
  %s1 = inlined_call_operand.vmem [shape: bf16[256,128], index: 1, kind: input, shape index: {}]
  %s2 = inlined_call_operand.vmem [shape: f32[1,128], index: 2, kind: input, shape index: {}]
  %s3 = inlined_call_operand.vmem [shape: bf16[256,128], index: 3, kind: output, shape index: {}]
  %s4 = sld [smem:[#allocation0]]
  $region94: #{gnn_forward.11} parent=0
    _
  %s6 = ssub.s32 1, %s4
  %s7 = scalar_select 0, %s6, %s4
  $region1: #{gnn_forward.11} parent=0
    #allocation3 [shape = 'u8[65536]{0}', space=vmem, size = 0x10000, scoped, tag = 'input window, operand 0']
    loop: start=0, step=1, limit=6
    $region2: #{gnn_forward.11} parent=1 // loop_pre_header
      _
    $region3: #{gnn_forward.11} parent=1 // loop_header
      %s9 = sphi 0, %s13
      %p10 = scmp.ge.s32.totalorder %s9, 6
      %s16 = sphi 0, %s35
      %s17 = sphi 0, %s31
      %s18 = sphi 0, %s27
      %s19 = sphi 0, %s16
      %s20 = sphi 0, %s17
      %s21 = sphi 0, %s18
      %s22 = sphi 0, %s19
      %s23 = sphi 0, %s20
      %s24 = sphi 0, %s21
      %s40 = sphi 0, %s42
      %s43 = sphi 0, %s40
      %s44 = sphi 0, %s43
      %s60 = sphi 0, %s44
      %s68 = sphi 0, %s70
      %s71 = sphi 0, %s68
      %s72 = sphi 0, %s71
      %s88 = sphi 0, %s72
      %s94 = sphi 0, %s96
      %s97 = sphi 0, %s94
      %s98 = sphi 0, %s97
      %s114 = sphi 0, %s98
      %s122 = sphi 0, %s124
      %s125 = sphi 0, %s122
      %s126 = sphi 0, %s125
      %s142 = sphi 0, %s126
    $region4: #{gnn_forward.11} parent=1 // loop_header_branch
      %12 = sbr.rel (%p10) target = $region8
    $region5: #{gnn_forward.11} parent=1 // loop_body
      %s14 = ssub.s32 %s9, 1
      %s15 = ssub.s32 %s9, 2
      %s25 = sadd.s32 1, %s18
      %p26 = scmp.ge.s32.totalorder %s25, 2
      %s27 = scalar_select %p26, 0, %s25
      %s28 = sadd.s32 1, %s17
      %s29 = scalar_select %p26, %s28, %s17
      %p30 = scmp.ge.s32.totalorder %s29, 1
      %s31 = scalar_select %p30, 0, %s29
      %s32 = sadd.s32 1, %s16
      %s33 = scalar_select %p30, %s32, %s16
      %p34 = scmp.ge.s32.totalorder %s33, 2
      %s35 = scalar_select %p34, 0, %s33
      %s36 = ssub.s32 %s16, %s35
      %s37 = ssub.s32 %s18, %s27
      %s38 = sor.u32 %s36, %s37
      %p39 = scmp.eq.s32.totalorder %s38, 0
      %s41 = sadd.s32 %s40, 1
      %s42 = scalar_select %p39, %s40, %s41
      %p45 = pneg %p39
      %p46 = scmp.eq.s32.totalorder %s9, 3
      %p47 = por %p45, %p46
      %p48 = scmp.ne.s32.totalorder %s40, %s43
      %p49 = scmp.eq.s32.totalorder %s9, 0
      %p50 = por %p48, %p49
      %p51 = scmp.ne.s32.totalorder %s40, %s43
      %p52 = scmp.eq.s32.totalorder %s14, 3
      %p53 = por %p51, %p52
      %p54 = scmp.ne.s32.totalorder %s43, %s44
      %p55 = scmp.eq.s32.totalorder %s14, 0
      %p56 = por %p54, %p55
      %p57 = scmp.ne.s32.totalorder %s43, %s44
      %p58 = scmp.eq.s32.totalorder %s15, 3
      %p59 = por %p57, %p58
      %p61 = scmp.ne.s32.totalorder %s44, %s60
      %p62 = scmp.eq.s32.totalorder %s15, 0
      %p63 = por %p61, %p62
      %s64 = ssub.s32 %s18, %s27
      %s65 = ssub.s32 %s17, %s31
      %s66 = sor.u32 %s64, %s65
      %p67 = scmp.eq.s32.totalorder %s66, 0
      %s69 = sadd.s32 %s68, 1
      %s70 = scalar_select %p67, %s68, %s69
      %p73 = pneg %p67
      %p74 = scmp.eq.s32.totalorder %s9, 3
      %p75 = por %p73, %p74
      %p76 = scmp.ne.s32.totalorder %s68, %s71
      %p77 = scmp.eq.s32.totalorder %s9, 0
      %p78 = por %p76, %p77
      %p79 = scmp.ne.s32.totalorder %s68, %s71
      %p80 = scmp.eq.s32.totalorder %s14, 3
      %p81 = por %p79, %p80
      %p82 = scmp.ne.s32.totalorder %s71, %s72
      %p83 = scmp.eq.s32.totalorder %s14, 0
      %p84 = por %p82, %p83
      %p85 = scmp.ne.s32.totalorder %s71, %s72
      %p86 = scmp.eq.s32.totalorder %s15, 3
      %p87 = por %p85, %p86
      %p89 = scmp.ne.s32.totalorder %s72, %s88
      %p90 = scmp.eq.s32.totalorder %s15, 0
      %p91 = por %p89, %p90
      %s92 = ssub.s32 %s17, %s31
      %p93 = scmp.eq.s32.totalorder %s92, 0
      %s95 = sadd.s32 %s94, 1
      %s96 = scalar_select %p93, %s94, %s95
      %p99 = pneg %p93
      %p100 = scmp.eq.s32.totalorder %s9, 3
      %p101 = por %p99, %p100
      %p102 = scmp.ne.s32.totalorder %s94, %s97
      %p103 = scmp.eq.s32.totalorder %s9, 0
      %p104 = por %p102, %p103
      %p105 = scmp.ne.s32.totalorder %s94, %s97
      %p106 = scmp.eq.s32.totalorder %s14, 3
      %p107 = por %p105, %p106
      %p108 = scmp.ne.s32.totalorder %s97, %s98
      %p109 = scmp.eq.s32.totalorder %s14, 0
      %p110 = por %p108, %p109
      %p111 = scmp.ne.s32.totalorder %s97, %s98
      %p112 = scmp.eq.s32.totalorder %s15, 3
      %p113 = por %p111, %p112
      %p115 = scmp.ne.s32.totalorder %s98, %s114
      %p116 = scmp.eq.s32.totalorder %s15, 0
      %p117 = por %p115, %p116
      %s118 = ssub.s32 %s16, %s35
      %s119 = ssub.s32 %s17, %s31
      %s120 = sor.u32 %s118, %s119
      %p121 = scmp.eq.s32.totalorder %s120, 0
      %s123 = sadd.s32 %s122, 1
      %s124 = scalar_select %p121, %s122, %s123
      %p127 = pneg %p121
      %p128 = scmp.eq.s32.totalorder %s9, 3
      %p129 = por %p127, %p128
      %p130 = scmp.ne.s32.totalorder %s122, %s125
      %p131 = scmp.eq.s32.totalorder %s9, 0
      %p132 = por %p130, %p131
      %p133 = scmp.ne.s32.totalorder %s122, %s125
      %p134 = scmp.eq.s32.totalorder %s14, 3
      %p135 = por %p133, %p134
      %p136 = scmp.ne.s32.totalorder %s125, %s126
      %p137 = scmp.eq.s32.totalorder %s14, 0
      %p138 = por %p136, %p137
      %p139 = scmp.ne.s32.totalorder %s125, %s126
      %p140 = scmp.eq.s32.totalorder %s15, 3
      %p141 = por %p139, %p140
      %p143 = scmp.ne.s32.totalorder %s126, %s142
      %p144 = scmp.eq.s32.totalorder %s15, 0
      %p145 = por %p143, %p144
      %p146 = scmp.le.s32.totalorder 1, %s9
      %p147 = scmp.lt.s32.totalorder %s9, 5
      %p148 = pnand %p146, %p147
      %p149 = pneg %p148
      // Predicated region
      $region9: #{gnn_forward.11} parent=5 // pred_check
        _
      $region10: #{gnn_forward.11} parent=5 // pred_check_branch
        %151 = sbr.rel (%p148) target = $region12
      $region11: #{gnn_forward.11} parent=5 // pred_region
        %s152 = ssub.s32 %s9, 1
        // Predicated region
        $region13: #{gnn_forward.11} parent=11 // pred_check
          %p153 = pneg %p110
        $region14: #{gnn_forward.11} parent=11 // pred_check_branch
          %155 = sbr.rel (%p153) target = $region16
        $region15: #{gnn_forward.11} parent=11 // pred_region
          %p156 = scmp.lt.s32.totalorder %s20, 0
          %s157 = scalar_select %p156, %s20, 0
          %s158 = scalar_lea.vmem %s2, %s157
        $region16: #{gnn_forward.11} parent=11 // pred_fallthru
          _
      $region12: #{gnn_forward.11} parent=5 // pred_fallthru
        _
      %p159 = scmp.lt.s32.totalorder %s9, 4
      // Predicated region
      $region17: #{gnn_forward.11} parent=5 // pred_check
        %p160 = pneg %p159
      $region18: #{gnn_forward.11} parent=5 // pred_check_branch
        %162 = sbr.rel (%p160) target = $region20
      $region19: #{gnn_forward.11} parent=5 // pred_region
        // Predicated region
        $region21: #{gnn_forward.11} parent=19 // pred_check
          %p163 = pneg %p50
        $region22: #{gnn_forward.11} parent=19 // pred_check_branch
          %165 = sbr.rel (%p163) target = $region24
        $region23: #{gnn_forward.11} parent=19 // pred_region
          %s166 = sand.u32 %s40, 1
          %s167 = sand.u32 %s40, 1
          %s168 = smul.addr %s167, 64
          %s169 = scalar_lea.vmem [#allocation3], %s168
          %s170 = smul.u32 16, %s16
          %s171 = smul.addr %s170, 2
          %s172 = sadd.s32 %s18, %s171
          %s173 = smul.addr %s172, 4
          %s174 = scalar_lea.vmem %s0, %s173
          // Predicated region
          $region25: #{gnn_forward.11} parent=23 // pred_check
            _
          $region26: #{gnn_forward.11} parent=23 // pred_check_branch
            %176 = sbr.rel (0) target = $region28
          $region27: #{gnn_forward.11} parent=23 // pred_region
            // Predicated region
            $region29: #{gnn_forward.11} parent=27 // pred_check
              _
            $region30: #{gnn_forward.11} parent=27 // pred_check_branch
              %178 = sbr.rel target = $region32
            $region31: #{gnn_forward.11} parent=27 // pred_region
              // Predicated region
              $region44: #{gnn_forward.11} parent=31 // pred_check
                _
              $region45: #{gnn_forward.11} parent=31 // pred_check_branch
                %224 = sbr.rel (0) target = $region47
              $region46: #{gnn_forward.11} parent=31 // pred_region
                loop: start=0, step=1, limit=1
                $region48: #{gnn_forward.11} parent=46 // loop_pre_header
                  _
                $region49: #{gnn_forward.11} parent=46 // loop_header
                  %s226 = sphi 0, %s230
                  %p227 = scmp.ge.s32.totalorder %s226, 1
                  %s231 = sphi %s174, %s174
                  %s232 = sphi %s169, %s169
                $region50: #{gnn_forward.11} parent=46 // loop_header_branch
                  %229 = sbr.rel (%p227) target = $region54
                $region51: #{gnn_forward.11} parent=46 // loop_body
                  _
                $region52: #{gnn_forward.11} parent=46 // loop_footer
                  %s230 = sadd.s32 1, %s226
                $region53: #{gnn_forward.11} parent=46 // loop_footer_branch
                  %225 = sbr.rel target = $region49
                $region54: #{gnn_forward.11} parent=46 // loop_exit
                  _
                %s234 = ssub.s32 16, 1
                loop: start=0, step=1, limit=1
                $region55: #{gnn_forward.11} parent=46 // loop_pre_header
                  _
                $region56: #{gnn_forward.11} parent=46 // loop_header
                  %s236 = sphi 0, %s240
                  %p237 = scmp.ge.s32.totalorder %s236, 1
                  %s241 = sphi %s174, %s174
                  %s242 = sphi %s169, %s169
                $region57: #{gnn_forward.11} parent=46 // loop_header_branch
                  %239 = sbr.rel (%p237) target = $region61
                $region58: #{gnn_forward.11} parent=46 // loop_body
                  %v243 = vld [vmem:[%s241] sm:%s234]
                  %244 = vst [vmem:[%s242] sm:%s234] %v243
                  %v245 = vld [vmem:[%s241 + $0x8] sm:%s234]
                  %246 = vst [vmem:[%s242 + $0x4] sm:%s234] %v245
                  %v247 = vld [vmem:[%s241 + $0x10] sm:%s234]
                  %248 = vst [vmem:[%s242 + $0x8] sm:%s234] %v247
                  %v249 = vld [vmem:[%s241 + $0x18] sm:%s234]
                  %250 = vst [vmem:[%s242 + $0xc] sm:%s234] %v249
                  %v251 = vld [vmem:[%s241 + $0x20] sm:%s234]
                  %252 = vst [vmem:[%s242 + $0x10] sm:%s234] %v251
                  %v253 = vld [vmem:[%s241 + $0x28] sm:%s234]
                  %254 = vst [vmem:[%s242 + $0x14] sm:%s234] %v253
                  %v255 = vld [vmem:[%s241 + $0x30] sm:%s234]
                  %256 = vst [vmem:[%s242 + $0x18] sm:%s234] %v255
                  %v257 = vld [vmem:[%s241 + $0x38] sm:%s234]
                  %258 = vst [vmem:[%s242 + $0x1c] sm:%s234] %v257
                  %v259 = vld [vmem:[%s241 + $0x40] sm:%s234]
                  %260 = vst [vmem:[%s242 + $0x20] sm:%s234] %v259
                  %v261 = vld [vmem:[%s241 + $0x48] sm:%s234]
                  %262 = vst [vmem:[%s242 + $0x24] sm:%s234] %v261
                  %v263 = vld [vmem:[%s241 + $0x50] sm:%s234]
                  %264 = vst [vmem:[%s242 + $0x28] sm:%s234] %v263
                  %v265 = vld [vmem:[%s241 + $0x58] sm:%s234]
                  %266 = vst [vmem:[%s242 + $0x2c] sm:%s234] %v265
                  %v267 = vld [vmem:[%s241 + $0x60] sm:%s234]
                  %268 = vst [vmem:[%s242 + $0x30] sm:%s234] %v267
                  %v269 = vld [vmem:[%s241 + $0x68] sm:%s234]
                  %270 = vst [vmem:[%s242 + $0x34] sm:%s234] %v269
                  %v271 = vld [vmem:[%s241 + $0x70] sm:%s234]
                  %272 = vst [vmem:[%s242 + $0x38] sm:%s234] %v271
                  %v273 = vld [vmem:[%s241 + $0x78] sm:%s234]
                  %274 = vst [vmem:[%s242 + $0x3c] sm:%s234] %v273
                $region59: #{gnn_forward.11} parent=46 // loop_footer
                  %s240 = sadd.s32 1, %s236
                $region60: #{gnn_forward.11} parent=46 // loop_footer_branch
                  %235 = sbr.rel target = $region56
                $region61: #{gnn_forward.11} parent=46 // loop_exit
                  _
              $region47: #{gnn_forward.11} parent=31 // pred_fallthru
                _
            $region32: #{gnn_forward.11} parent=27 // pred_fallthru
              _
            // Predicated region
            $region33: #{gnn_forward.11} parent=27 // pred_check
              _
            $region34: #{gnn_forward.11} parent=27 // pred_check_branch
              %180 = sbr.rel (0) target = $region36
            $region35: #{gnn_forward.11} parent=27 // pred_region
              %s182 = ssub.s32 16, 1
              loop: start=0, step=1, limit=1
              $region37: #{gnn_forward.11} parent=35 // loop_pre_header
                _
              $region38: #{gnn_forward.11} parent=35 // loop_header
                %s184 = sphi 0, %s188
                %p185 = scmp.ge.s32.totalorder %s184, 1
                %s189 = sphi %s174, %s174
                %s190 = sphi %s169, %s169
              $region39: #{gnn_forward.11} parent=35 // loop_header_branch
                %187 = sbr.rel (%p185) target = $region43
              $region40: #{gnn_forward.11} parent=35 // loop_body
                %v191 = vld [vmem:[%s189] sm:%s182]
                %192 = vst [vmem:[%s190] sm:%s182] %v191
                %v193 = vld [vmem:[%s189 + $0x8] sm:%s182]
                %194 = vst [vmem:[%s190 + $0x4] sm:%s182] %v193
                %v195 = vld [vmem:[%s189 + $0x10] sm:%s182]
                %196 = vst [vmem:[%s190 + $0x8] sm:%s182] %v195
                %v197 = vld [vmem:[%s189 + $0x18] sm:%s182]
                %198 = vst [vmem:[%s190 + $0xc] sm:%s182] %v197
                %v199 = vld [vmem:[%s189 + $0x20] sm:%s182]
                %200 = vst [vmem:[%s190 + $0x10] sm:%s182] %v199
                %v201 = vld [vmem:[%s189 + $0x28] sm:%s182]
                %202 = vst [vmem:[%s190 + $0x14] sm:%s182] %v201
                %v203 = vld [vmem:[%s189 + $0x30] sm:%s182]
                %204 = vst [vmem:[%s190 + $0x18] sm:%s182] %v203
                %v205 = vld [vmem:[%s189 + $0x38] sm:%s182]
                %206 = vst [vmem:[%s190 + $0x1c] sm:%s182] %v205
                %v207 = vld [vmem:[%s189 + $0x40] sm:%s182]
                %208 = vst [vmem:[%s190 + $0x20] sm:%s182] %v207
                %v209 = vld [vmem:[%s189 + $0x48] sm:%s182]
                %210 = vst [vmem:[%s190 + $0x24] sm:%s182] %v209
                %v211 = vld [vmem:[%s189 + $0x50] sm:%s182]
                %212 = vst [vmem:[%s190 + $0x28] sm:%s182] %v211
                %v213 = vld [vmem:[%s189 + $0x58] sm:%s182]
                %214 = vst [vmem:[%s190 + $0x2c] sm:%s182] %v213
                %v215 = vld [vmem:[%s189 + $0x60] sm:%s182]
                %216 = vst [vmem:[%s190 + $0x30] sm:%s182] %v215
                %v217 = vld [vmem:[%s189 + $0x68] sm:%s182]
                %218 = vst [vmem:[%s190 + $0x34] sm:%s182] %v217
                %v219 = vld [vmem:[%s189 + $0x70] sm:%s182]
                %220 = vst [vmem:[%s190 + $0x38] sm:%s182] %v219
                %v221 = vld [vmem:[%s189 + $0x78] sm:%s182]
                %222 = vst [vmem:[%s190 + $0x3c] sm:%s182] %v221
              $region41: #{gnn_forward.11} parent=35 // loop_footer
                %s188 = sadd.s32 1, %s184
              $region42: #{gnn_forward.11} parent=35 // loop_footer_branch
                %183 = sbr.rel target = $region38
              $region43: #{gnn_forward.11} parent=35 // loop_exit
                _
            $region36: #{gnn_forward.11} parent=27 // pred_fallthru
              _
          $region28: #{gnn_forward.11} parent=23 // pred_fallthru
            _
          %275 = vnop
        $region24: #{gnn_forward.11} parent=19 // pred_fallthru
          _
        // Predicated region
        $region62: #{gnn_forward.11} parent=19 // pred_check
          %p276 = pneg %p78
        $region63: #{gnn_forward.11} parent=19 // pred_check_branch
          %278 = sbr.rel (%p276) target = $region65
        $region64: #{gnn_forward.11} parent=19 // pred_region
          %s279 = smul.u32 16, %s18
          %p280 = scmp.lt.s32.totalorder %s279, 31
          %s281 = scalar_select %p280, %s279, 31
          %p282 = scmp.lt.s32.totalorder %s17, 0
          %s283 = scalar_select %p282, %s17, 0
          %s284 = sadd.s32 %s283, %s281
          %s285 = smul.addr %s284, 4
          %s286 = scalar_lea.vmem %s1, %s285
          %s287 = smul.u32 16, %s18
        $region65: #{gnn_forward.11} parent=19 // pred_fallthru
          _
      $region20: #{gnn_forward.11} parent=5 // pred_fallthru
        _
      %p288 = scmp.le.s32.totalorder 1, %s9
      %p289 = scmp.lt.s32.totalorder %s9, 5
      %p290 = pnand %p288, %p289
      %p291 = pneg %p290
      // Predicated region
      $region66: #{gnn_forward.11} parent=5 // pred_check
        _
      $region67: #{gnn_forward.11} parent=5 // pred_check_branch
        %293 = sbr.rel (%p290) target = $region69
      $region68: #{gnn_forward.11} parent=5 // pred_region
        %s294 = ssub.s32 %s9, 1
        %s295 = sand.u32 %s43, 1
        %s296 = sand.u32 %s43, 1
        %s297 = smul.addr %s296, 64
        %s298 = scalar_lea.vmem [#allocation3], %s297
        // Predicated region
        $region70: #{gnn_forward.11} parent=68 // pred_check
          %p299 = pneg %p56
        $region71: #{gnn_forward.11} parent=68 // pred_check_branch
          %301 = sbr.rel (%p299) target = $region73
        $region72: #{gnn_forward.11} parent=68 // pred_region
          _
        $region73: #{gnn_forward.11} parent=68 // pred_fallthru
          _
        %s302 = sand.u32 %s43, 1
        %s303 = sand.u32 %s43, 1
        %s304 = smul.addr %s303, 64
        %s305 = scalar_lea.vmem [#allocation3], %s304
        %p306 = pneg %p56
        %p307 = pneg %p53
        %s308 = smul.u32 16, %s21
        %p309 = scmp.lt.s32.totalorder %s308, 31
        %s310 = scalar_select %p309, %s308, 31
        %p311 = scmp.lt.s32.totalorder %s20, 0
        %s312 = scalar_select %p311, %s20, 0
        %s313 = sadd.s32 %s312, %s310
        %s314 = smul.addr %s313, 4
        %s315 = scalar_lea.vmem %s1, %s314
        %p316 = pneg %p84
        %p317 = pneg %p81
        %p318 = scmp.lt.s32.totalorder %s20, 0
        %s319 = scalar_select %p318, %s20, 0
        %s320 = scalar_lea.vmem %s2, %s319
        %p321 = pneg %p110
        %p322 = pneg %p107
        %p323 = pneg %p138
        %p324 = pneg %p135
        %s325 = smul.u32 16, %s19
        %p326 = scmp.lt.s32.totalorder %s325, 31
        %s327 = scalar_select %p326, %s325, 31
        %p328 = scmp.lt.s32.totalorder %s20, 0
        %s329 = scalar_select %p328, %s20, 0
        %s330 = sadd.s32 %s329, %s327
        %s331 = smul.addr %s330, 4
        %s332 = scalar_lea.vmem %s3, %s331
        %s333 = smul.u32 16, %s19
        %s334 = smul.u32 16, %s21
        %p335 = scmp.lt.s32.totalorder %s334, 31
        %s336 = scalar_select %p335, %s334, 31
        %p337 = scmp.lt.s32.totalorder %s20, 0
        %s338 = scalar_select %p337, %s20, 0
        %s339 = sadd.s32 %s338, %s336
        %s340 = smul.addr %s339, 4
        %s341 = scalar_lea.vmem %s1, %s340
        %s342 = smul.u32 16, %s21
        %p343 = scmp.lt.s32.totalorder %s20, 0
        %s344 = scalar_select %p343, %s20, 0
        %s345 = scalar_lea.vmem %s2, %s344
        %s346 = smul.u32 16, %s19
        %p347 = scmp.lt.s32.totalorder %s346, 31
        %s348 = scalar_select %p347, %s346, 31
        %p349 = scmp.lt.s32.totalorder %s20, 0
        %s350 = scalar_select %p349, %s20, 0
        %s351 = sadd.s32 %s350, %s348
        %s352 = smul.addr %s351, 4
        %s353 = scalar_lea.vmem %s3, %s352
        %s354 = smul.u32 16, %s19
        %p356 = scmp.eq.s32.totalorder %s21, 0
        // Predicated region
        $region74: #{gnn_forward.11} parent=68 // pred_check
          %p357 = pneg %p356
        $region75: #{gnn_forward.11} parent=68 // pred_check_branch
          %359 = sbr.rel (%p357) target = $region77
        $region76: #{gnn_forward.11} parent=68 // pred_region
          %360 = vst [vmem:[#allocation2] sm:$0xff] 0.0
          %361 = vst [vmem:[#allocation2 + $0x8] sm:$0xff] 0.0
          %362 = vst [vmem:[#allocation2 + $0x10] sm:$0xff] 0.0
          %363 = vst [vmem:[#allocation2 + $0x18] sm:$0xff] 0.0
          %364 = vst [vmem:[#allocation2 + $0x20] sm:$0xff] 0.0
          %365 = vst [vmem:[#allocation2 + $0x28] sm:$0xff] 0.0
          %366 = vst [vmem:[#allocation2 + $0x30] sm:$0xff] 0.0
          %367 = vst [vmem:[#allocation2 + $0x38] sm:$0xff] 0.0
          %368 = vst [vmem:[#allocation2 + $0x40] sm:$0xff] 0.0
          %369 = vst [vmem:[#allocation2 + $0x48] sm:$0xff] 0.0
          %370 = vst [vmem:[#allocation2 + $0x50] sm:$0xff] 0.0
          %371 = vst [vmem:[#allocation2 + $0x58] sm:$0xff] 0.0
          %372 = vst [vmem:[#allocation2 + $0x60] sm:$0xff] 0.0
          %373 = vst [vmem:[#allocation2 + $0x68] sm:$0xff] 0.0
          %374 = vst [vmem:[#allocation2 + $0x70] sm:$0xff] 0.0
          %375 = vst [vmem:[#allocation2 + $0x78] sm:$0xff] 0.0
        $region77: #{gnn_forward.11} parent=68 // pred_fallthru
          _
        %v376 = vld [vmem:[#allocation2] sm:$0xff]
        %v377 = vld [vmem:[#allocation2 + $0x8] sm:$0xff]
        %v378 = vld [vmem:[#allocation2 + $0x10] sm:$0xff]
        %v379 = vld [vmem:[#allocation2 + $0x18] sm:$0xff]
        %v380 = vld [vmem:[#allocation2 + $0x20] sm:$0xff]
        %v381 = vld [vmem:[#allocation2 + $0x28] sm:$0xff]
        %v382 = vld [vmem:[#allocation2 + $0x30] sm:$0xff]
        %v383 = vld [vmem:[#allocation2 + $0x38] sm:$0xff]
        %v384 = vld [vmem:[#allocation2 + $0x40] sm:$0xff]
        %v385 = vld [vmem:[#allocation2 + $0x48] sm:$0xff]
        %v386 = vld [vmem:[#allocation2 + $0x50] sm:$0xff]
        %v387 = vld [vmem:[#allocation2 + $0x58] sm:$0xff]
        %v388 = vld [vmem:[#allocation2 + $0x60] sm:$0xff]
        %v389 = vld [vmem:[#allocation2 + $0x68] sm:$0xff]
        %v390 = vld [vmem:[#allocation2 + $0x70] sm:$0xff]
        %v391 = vld [vmem:[#allocation2 + $0x78] sm:$0xff]
        %v392 = vld [vmem:[%s298] sm:$0xf]
        %v393 = vld [vmem:[%s298 + $0x4] sm:$0xf]
        %v394 = vld [vmem:[%s298 + $0x8] sm:$0xf]
        %v395 = vld [vmem:[%s298 + $0xc] sm:$0xf]
        %v396 = vld [vmem:[%s298 + $0x10] sm:$0xf]
        %v397 = vld [vmem:[%s298 + $0x14] sm:$0xf]
        %v398 = vld [vmem:[%s298 + $0x18] sm:$0xf]
        %v399 = vld [vmem:[%s298 + $0x1c] sm:$0xf]
        %v400 = vld [vmem:[%s298 + $0x20] sm:$0xf]
        %v401 = vld [vmem:[%s298 + $0x24] sm:$0xf]
        %v402 = vld [vmem:[%s298 + $0x28] sm:$0xf]
        %v403 = vld [vmem:[%s298 + $0x2c] sm:$0xf]
        %v404 = vld [vmem:[%s298 + $0x30] sm:$0xf]
        %v405 = vld [vmem:[%s298 + $0x34] sm:$0xf]
        %v406 = vld [vmem:[%s298 + $0x38] sm:$0xf]
        %v407 = vld [vmem:[%s298 + $0x3c] sm:$0xf]
        %v408 = vld [vmem:[%s341] sm:$0xf]
        %v409 = vld [vmem:[%s341 + $0x4] sm:$0xf]
        %v410 = vld [vmem:[%s341 + $0x8] sm:$0xf]
        %v411 = vld [vmem:[%s341 + $0xc] sm:$0xf]
        %v412 = vld [vmem:[%s341 + $0x10] sm:$0xf]
        %v413 = vld [vmem:[%s341 + $0x14] sm:$0xf]
        %v414 = vld [vmem:[%s341 + $0x18] sm:$0xf]
        %v415 = vld [vmem:[%s341 + $0x1c] sm:$0xf]
        %v416 = vld [vmem:[%s341 + $0x20] sm:$0xf]
        %v417 = vld [vmem:[%s341 + $0x24] sm:$0xf]
        %v418 = vld [vmem:[%s341 + $0x28] sm:$0xf]
        %v419 = vld [vmem:[%s341 + $0x2c] sm:$0xf]
        %v420 = vld [vmem:[%s341 + $0x30] sm:$0xf]
        %v421 = vld [vmem:[%s341 + $0x34] sm:$0xf]
        %v422 = vld [vmem:[%s341 + $0x38] sm:$0xf]
        %v423 = vld [vmem:[%s341 + $0x3c] sm:$0xf]
        %v440 = vunpack.c.l.b16 %v392
        %v441 = vunpack.c.l.b16 %v393
        %v442 = vunpack.c.l.b16 %v394
        %v443 = vunpack.c.l.b16 %v395
        %v444 = vunpack.c.l.b16 %v396
        %v445 = vunpack.c.l.b16 %v397
        %v446 = vunpack.c.l.b16 %v398
        %v447 = vunpack.c.l.b16 %v399
        %v448 = vunpack.c.l.b16 %v400
        %v449 = vunpack.c.l.b16 %v401
        %v450 = vunpack.c.l.b16 %v402
        %v451 = vunpack.c.l.b16 %v403
        %v452 = vunpack.c.l.b16 %v404
        %v453 = vunpack.c.l.b16 %v405
        %v454 = vunpack.c.l.b16 %v406
        %v455 = vunpack.c.l.b16 %v407
        %v456 = vpack.c.b16 %v441, %v440
        %v457 = vpack.c.b16 %v443, %v442
        %v458 = vpack.c.b16 %v445, %v444
        %v459 = vpack.c.b16 %v447, %v446
        %v460 = vpack.c.b16 %v449, %v448
        %v461 = vpack.c.b16 %v451, %v450
        %v462 = vpack.c.b16 %v453, %v452
        %v463 = vpack.c.b16 %v455, %v454
        %v488 = vunpack.c.l.b16 %v408
        %v489 = vunpack.c.l.b16 %v409
        %v490 = vunpack.c.l.b16 %v410
        %v491 = vunpack.c.l.b16 %v411
        %v492 = vunpack.c.l.b16 %v412
        %v493 = vunpack.c.l.b16 %v413
        %v494 = vunpack.c.l.b16 %v414
        %v495 = vunpack.c.l.b16 %v415
        %v496 = vunpack.c.l.b16 %v416
        %v497 = vunpack.c.l.b16 %v417
        %v498 = vunpack.c.l.b16 %v418
        %v499 = vunpack.c.l.b16 %v419
        %v500 = vunpack.c.l.b16 %v420
        %v501 = vunpack.c.l.b16 %v421
        %v502 = vunpack.c.l.b16 %v422
        %v503 = vunpack.c.l.b16 %v423
        %v504 = vpack.c.b16 %v489, %v488
        %v505 = vpack.c.b16 %v491, %v490
        %v506 = vpack.c.b16 %v493, %v492
        %v507 = vpack.c.b16 %v495, %v494
        %v508 = vpack.c.b16 %v497, %v496
        %v509 = vpack.c.b16 %v499, %v498
        %v510 = vpack.c.b16 %v501, %v500
        %v511 = vpack.c.b16 %v503, %v502
        %520 = vmatprep.subr.bf16.mxu0 0
        %521 = vmatpush1.bf16.msra.mxu0 %v511
        %522 = vmatprep.subr.bf16.mxu0 0
        %523 = vmatpush1.bf16.msra.mxu0 %v510
        %524 = vmatprep.subr.bf16.mxu0 0
        %525 = vmatpush1.bf16.msra.mxu0 %v509
        %526 = vmatprep.subr.bf16.mxu0 0
        %527 = vmatpush1.bf16.msra.mxu0 %v508
        %528 = vmatprep.subr.bf16.mxu0 0
        %529 = vmatpush1.bf16.msra.mxu0 %v507
        %530 = vmatprep.subr.bf16.mxu0 0
        %531 = vmatpush1.bf16.msra.mxu0 %v506
        %532 = vmatprep.subr.bf16.mxu0 0
        %533 = vmatpush1.bf16.msra.mxu0 %v505
        %534 = vmatprep.subr.bf16.mxu0 0
        %535 = vmatpush1.bf16.msra.mxu0 %v504
        %536 = vmatprep.subr.bf16.mxu0 0
        %537 = vmatpush2.bf16.msra.mxu0 0
        %538 = vmatprep.subr.bf16.mxu0 0
        %539 = vmatpush2.bf16.msra.mxu0 0
        %540 = vmatprep.subr.bf16.mxu0 0
        %541 = vmatpush2.bf16.msra.mxu0 0
        %542 = vmatprep.subr.bf16.mxu0 0
        %543 = vmatpush2.bf16.msra.mxu0 0
        %544 = vmatprep.subr.bf16.mxu0 0
        %545 = vmatpush2.bf16.msra.mxu0 0
        %546 = vmatprep.subr.bf16.mxu0 0
        %547 = vmatpush2.bf16.msra.mxu0 0
        %548 = vmatprep.subr.bf16.mxu0 0
        %549 = vmatpush2.bf16.msra.mxu0 0
        %550 = vmatprep.subr.bf16.mxu0 0
        %551 = vmatpush2.bf16.msra.mxu0 0
        %552 = vmatprep.mubr.bf16.mxu0 0
        %553 = vmatmul.mubr.bf16.gmra.mxu0 %v456
        %v554 = vpop.f32.mrf.mxu0
        %v555 = vadd.f32 0.0, %v554
        %v556 = vpop.f32.mrf.mxu0
        %v557 = vpop.f32.mrf.mxu0
        %v558 = vadd.f32 0.0, %v557
        %v559 = vpop.f32.mrf.mxu0
        %560 = vmatprep.mubr.bf16.mxu0 0
        %561 = vmatmul.mubr.bf16.gmra.mxu0 %v457
        %v562 = vpop.f32.mrf.mxu0
        %v563 = vadd.f32 0.0, %v562
        %v564 = vpop.f32.mrf.mxu0
        %v565 = vpop.f32.mrf.mxu0
        %v566 = vadd.f32 0.0, %v565
        %v567 = vpop.f32.mrf.mxu0
        %568 = vmatprep.mubr.bf16.mxu0 0
        %569 = vmatmul.mubr.bf16.gmra.mxu0 %v458
        %v570 = vpop.f32.mrf.mxu0
        %v571 = vadd.f32 0.0, %v570
        %v572 = vpop.f32.mrf.mxu0
        %v573 = vpop.f32.mrf.mxu0
        %v574 = vadd.f32 0.0, %v573
        %v575 = vpop.f32.mrf.mxu0
        %576 = vmatprep.mubr.bf16.mxu0 0
        %577 = vmatmul.mubr.bf16.gmra.mxu0 %v459
        %v578 = vpop.f32.mrf.mxu0
        %v579 = vadd.f32 0.0, %v578
        %v580 = vpop.f32.mrf.mxu0
        %v581 = vpop.f32.mrf.mxu0
        %v582 = vadd.f32 0.0, %v581
        %v583 = vpop.f32.mrf.mxu0
        %584 = vmatprep.mubr.bf16.mxu0 0
        %585 = vmatmul.mubr.bf16.gmra.mxu0 %v460
        %v586 = vpop.f32.mrf.mxu0
        %v587 = vadd.f32 0.0, %v586
        %v588 = vpop.f32.mrf.mxu0
        %v589 = vpop.f32.mrf.mxu0
        %v590 = vadd.f32 0.0, %v589
        %v591 = vpop.f32.mrf.mxu0
        %592 = vmatprep.mubr.bf16.mxu0 0
        %593 = vmatmul.mubr.bf16.gmra.mxu0 %v461
        %v594 = vpop.f32.mrf.mxu0
        %v595 = vadd.f32 0.0, %v594
        %v596 = vpop.f32.mrf.mxu0
        %v597 = vpop.f32.mrf.mxu0
        %v598 = vadd.f32 0.0, %v597
        %v599 = vpop.f32.mrf.mxu0
        %600 = vmatprep.mubr.bf16.mxu0 0
        %601 = vmatmul.mubr.bf16.gmra.mxu0 %v462
        %v602 = vpop.f32.mrf.mxu0
        %v603 = vadd.f32 0.0, %v602
        %v604 = vpop.f32.mrf.mxu0
        %v605 = vpop.f32.mrf.mxu0
        %v606 = vadd.f32 0.0, %v605
        %v607 = vpop.f32.mrf.mxu0
        %608 = vmatprep.mubr.bf16.mxu0 0
        %609 = vmatmul.mubr.bf16.gmra.mxu0 %v463
        %v610 = vpop.f32.mrf.mxu0
        %v611 = vadd.f32 0.0, %v610
        %v612 = vpop.f32.mrf.mxu0
        %v613 = vpop.f32.mrf.mxu0
        %v614 = vadd.f32 0.0, %v613
        %v615 = vpop.f32.mrf.mxu0
        %616 = vdwg.mxu0
        %v617 = vadd.f32 %v376, %v555
        %v618 = vadd.f32 %v377, %v558
        %v619 = vadd.f32 %v378, %v563
        %v620 = vadd.f32 %v379, %v566
        %v621 = vadd.f32 %v380, %v571
        %v622 = vadd.f32 %v381, %v574
        %v623 = vadd.f32 %v382, %v579
        %v624 = vadd.f32 %v383, %v582
        %v625 = vadd.f32 %v384, %v587
        %v626 = vadd.f32 %v385, %v590
        %v627 = vadd.f32 %v386, %v595
        %v628 = vadd.f32 %v387, %v598
        %v629 = vadd.f32 %v388, %v603
        %v630 = vadd.f32 %v389, %v606
        %v631 = vadd.f32 %v390, %v611
        %v632 = vadd.f32 %v391, %v614
        %633 = vst [vmem:[#allocation2] sm:$0xff] %v617
        %634 = vst [vmem:[#allocation2 + $0x8] sm:$0xff] %v618
        %635 = vst [vmem:[#allocation2 + $0x10] sm:$0xff] %v619
        %636 = vst [vmem:[#allocation2 + $0x18] sm:$0xff] %v620
        %637 = vst [vmem:[#allocation2 + $0x20] sm:$0xff] %v621
        %638 = vst [vmem:[#allocation2 + $0x28] sm:$0xff] %v622
        %639 = vst [vmem:[#allocation2 + $0x30] sm:$0xff] %v623
        %640 = vst [vmem:[#allocation2 + $0x38] sm:$0xff] %v624
        %641 = vst [vmem:[#allocation2 + $0x40] sm:$0xff] %v625
        %642 = vst [vmem:[#allocation2 + $0x48] sm:$0xff] %v626
        %643 = vst [vmem:[#allocation2 + $0x50] sm:$0xff] %v627
        %644 = vst [vmem:[#allocation2 + $0x58] sm:$0xff] %v628
        %645 = vst [vmem:[#allocation2 + $0x60] sm:$0xff] %v629
        %646 = vst [vmem:[#allocation2 + $0x68] sm:$0xff] %v630
        %647 = vst [vmem:[#allocation2 + $0x70] sm:$0xff] %v631
        %648 = vst [vmem:[#allocation2 + $0x78] sm:$0xff] %v632
        %p649 = scmp.eq.s32.totalorder %s21, 1
        // Predicated region
        $region78: #{gnn_forward.11} parent=68 // pred_check
          %p650 = pneg %p649
        $region79: #{gnn_forward.11} parent=68 // pred_check_branch
          %652 = sbr.rel (%p650) target = $region81
        $region80: #{gnn_forward.11} parent=68 // pred_region
          %v653 = vld [vmem:[#allocation2] sm:$0xff]
          %v654 = vld [vmem:[#allocation2 + $0x8] sm:$0xff]
          %v655 = vld [vmem:[#allocation2 + $0x10] sm:$0xff]
          %v656 = vld [vmem:[#allocation2 + $0x18] sm:$0xff]
          %v657 = vld [vmem:[#allocation2 + $0x20] sm:$0xff]
          %v658 = vld [vmem:[#allocation2 + $0x28] sm:$0xff]
          %v659 = vld [vmem:[#allocation2 + $0x30] sm:$0xff]
          %v660 = vld [vmem:[#allocation2 + $0x38] sm:$0xff]
          %v661 = vld [vmem:[#allocation2 + $0x40] sm:$0xff]
          %v662 = vld [vmem:[#allocation2 + $0x48] sm:$0xff]
          %v663 = vld [vmem:[#allocation2 + $0x50] sm:$0xff]
          %v664 = vld [vmem:[#allocation2 + $0x58] sm:$0xff]
          %v665 = vld [vmem:[#allocation2 + $0x60] sm:$0xff]
          %v666 = vld [vmem:[#allocation2 + $0x68] sm:$0xff]
          %v667 = vld [vmem:[#allocation2 + $0x70] sm:$0xff]
          %v668 = vld [vmem:[#allocation2 + $0x78] sm:$0xff]
          %v669 = vld [vmem:[%s345] sm:$0x1]
          %v671 = vlaneseq
          %v672 = vshrl.u32 %v671, 7
          %v673 = vsub.s32 0, %v672
          %v674 = vrot.slane %v669, %v673
          %v676 = vadd.f32 %v653, %v674
          %v677 = vadd.f32 %v654, %v674
          %v678 = vadd.f32 %v655, %v674
          %v679 = vadd.f32 %v656, %v674
          %v680 = vadd.f32 %v657, %v674
          %v681 = vadd.f32 %v658, %v674
          %v682 = vadd.f32 %v659, %v674
          %v683 = vadd.f32 %v660, %v674
          %v684 = vadd.f32 %v661, %v674
          %v685 = vadd.f32 %v662, %v674
          %v686 = vadd.f32 %v663, %v674
          %v687 = vadd.f32 %v664, %v674
          %v688 = vadd.f32 %v665, %v674
          %v689 = vadd.f32 %v666, %v674
          %v690 = vadd.f32 %v667, %v674
          %v691 = vadd.f32 %v668, %v674
          %v692 = vpack.c.bf16 %v677, %v676
          %v693 = vpack.c.bf16 %v679, %v678
          %v694 = vpack.c.bf16 %v681, %v680
          %v695 = vpack.c.bf16 %v683, %v682
          %v696 = vpack.c.bf16 %v685, %v684
          %v697 = vpack.c.bf16 %v687, %v686
          %v698 = vpack.c.bf16 %v689, %v688
          %v699 = vpack.c.bf16 %v691, %v690
          %v708 = vunpack.c.l.b16 %v692
          %v709 = vunpack.c.h.b16 %v692
          %v710 = vunpack.c.l.b16 %v693
          %v711 = vunpack.c.h.b16 %v693
          %v712 = vunpack.c.l.b16 %v694
          %v713 = vunpack.c.h.b16 %v694
          %v714 = vunpack.c.l.b16 %v695
          %v715 = vunpack.c.h.b16 %v695
          %v716 = vunpack.c.l.b16 %v696
          %v717 = vunpack.c.h.b16 %v696
          %v718 = vunpack.c.l.b16 %v697
          %v719 = vunpack.c.h.b16 %v697
          %v720 = vunpack.c.l.b16 %v698
          %v721 = vunpack.c.h.b16 %v698
          %v722 = vunpack.c.l.b16 %v699
          %v723 = vunpack.c.h.b16 %v699
          %v724 = vpack.c.b16 %v708, %v708
          %v725 = vpack.c.b16 %v709, %v709
          %v726 = vpack.c.b16 %v710, %v710
          %v727 = vpack.c.b16 %v711, %v711
          %v728 = vpack.c.b16 %v712, %v712
          %v729 = vpack.c.b16 %v713, %v713
          %v730 = vpack.c.b16 %v714, %v714
          %v731 = vpack.c.b16 %v715, %v715
          %v732 = vpack.c.b16 %v716, %v716
          %v733 = vpack.c.b16 %v717, %v717
          %v734 = vpack.c.b16 %v718, %v718
          %v735 = vpack.c.b16 %v719, %v719
          %v736 = vpack.c.b16 %v720, %v720
          %v737 = vpack.c.b16 %v721, %v721
          %v738 = vpack.c.b16 %v722, %v722
          %v739 = vpack.c.b16 %v723, %v723
          %756 = vst [vmem:[%s353] sm:$0xf] %v724
          %757 = vst [vmem:[%s353 + $0x4] sm:$0xf] %v725
          %758 = vst [vmem:[%s353 + $0x8] sm:$0xf] %v726
          %759 = vst [vmem:[%s353 + $0xc] sm:$0xf] %v727
          %760 = vst [vmem:[%s353 + $0x10] sm:$0xf] %v728
          %761 = vst [vmem:[%s353 + $0x14] sm:$0xf] %v729
          %762 = vst [vmem:[%s353 + $0x18] sm:$0xf] %v730
          %763 = vst [vmem:[%s353 + $0x1c] sm:$0xf] %v731
          %764 = vst [vmem:[%s353 + $0x20] sm:$0xf] %v732
          %765 = vst [vmem:[%s353 + $0x24] sm:$0xf] %v733
          %766 = vst [vmem:[%s353 + $0x28] sm:$0xf] %v734
          %767 = vst [vmem:[%s353 + $0x2c] sm:$0xf] %v735
          %768 = vst [vmem:[%s353 + $0x30] sm:$0xf] %v736
          %769 = vst [vmem:[%s353 + $0x34] sm:$0xf] %v737
          %770 = vst [vmem:[%s353 + $0x38] sm:$0xf] %v738
          %771 = vst [vmem:[%s353 + $0x3c] sm:$0xf] %v739
        $region81: #{gnn_forward.11} parent=68 // pred_fallthru
          _
        %s772 = smul.u32 16, %s19
        %p773 = scmp.lt.s32.totalorder %s772, 31
        %s774 = scalar_select %p773, %s772, 31
        %p775 = scmp.lt.s32.totalorder %s20, 0
        %s776 = scalar_select %p775, %s20, 0
        %s777 = sadd.s32 %s776, %s774
        %s778 = smul.addr %s777, 4
        %s779 = scalar_lea.vmem %s3, %s778
        // Predicated region
        $region82: #{gnn_forward.11} parent=68 // pred_check
          %p780 = pneg %p135
        $region83: #{gnn_forward.11} parent=68 // pred_check_branch
          %782 = sbr.rel (%p780) target = $region85
        $region84: #{gnn_forward.11} parent=68 // pred_region
          %s783 = smul.u32 16, %s19
        $region85: #{gnn_forward.11} parent=68 // pred_fallthru
          _
      $region69: #{gnn_forward.11} parent=5 // pred_fallthru
        _
      %p784 = scmp.le.s32.totalorder 2, %s9
      // Predicated region
      $region86: #{gnn_forward.11} parent=5 // pred_check
        %p785 = pneg %p784
      $region87: #{gnn_forward.11} parent=5 // pred_check_branch
        %787 = sbr.rel (%p785) target = $region89
      $region88: #{gnn_forward.11} parent=5 // pred_region
        %s788 = ssub.s32 %s9, 2
        // Predicated region
        $region90: #{gnn_forward.11} parent=88 // pred_check
          %p789 = pneg %p141
        $region91: #{gnn_forward.11} parent=88 // pred_check_branch
          %791 = sbr.rel (%p789) target = $region93
        $region92: #{gnn_forward.11} parent=88 // pred_region
          %s792 = smul.u32 16, %s22
          %p793 = scmp.lt.s32.totalorder %s792, 31
          %s794 = scalar_select %p793, %s792, 31
          %p795 = scmp.lt.s32.totalorder %s23, 0
          %s796 = scalar_select %p795, %s23, 0
          %s797 = sadd.s32 %s796, %s794
          %s798 = smul.addr %s797, 4
          %s799 = scalar_lea.vmem %s3, %s798
        $region93: #{gnn_forward.11} parent=88 // pred_fallthru
          _
      $region89: #{gnn_forward.11} parent=5 // pred_fallthru
        _
    $region6: #{gnn_forward.11} parent=1 // loop_footer
      %s13 = sadd.s32 1, %s9
    $region7: #{gnn_forward.11} parent=1 // loop_footer_branch
      %8 = sbr.rel target = $region3
    $region8: #{gnn_forward.11} parent=1 // loop_exit
      _

</llo_original>
